<compile_context>
chip_gen: v7x
topology: tpu7x:2x2x1
jax: 0.10.0
libtpu: 0.0.40
codegen_flags: <defaults>
</compile_context>

<pallas_src>
import functools

import jax
import jax.numpy as jnp
from jax import lax
from jax.experimental import pallas as pl
from jax.experimental.pallas import tpu as pltpu

MEMORY_SIZE = 19      # hard-coded in Memory_sup.read (.view(B, H, W, 19))
FEATURE_DIM = 32      # feature_dim == input_feature_dim (Writingnet asserts equality)
BN_EPS = 1e-5         # nn.BatchNorm2d default eps (training-mode batch stats)
NORM_EPS = 1e-12      # F.normalize default eps
TILE_N = 2048         # pixel (lane-axis) tile; multiple of 128, VMEM-safe on all chips


def _compute_tile(q, w1, wm_mem, shift, c):
    """Shared per-tile math: normalize -> scores -> shared exp -> slot softmax -> conv."""
    # F.normalize(query, dim=channel): x * rsqrt(max(sum(x^2), eps^2)) == x / max(||x||, eps)
    ss = jnp.sum(q * q, axis=0, keepdims=True)
    qn = q * lax.rsqrt(jnp.maximum(ss, NORM_EPS * NORM_EPS))

    # Single MXU push: [Wq ; m_items] @ qn  ->  [y_q ; score]
    z = jnp.dot(w1, qn, preferred_element_type=jnp.float32)      # (C+M, TN)
    y_q = z[:c, :]                                               # (C, TN)
    score = z[c:, :]                                             # (M, TN)

    # Shared exponential for both softmaxes.  `shift` is a global upper bound on the
    # scores (||qn|| <= 1, shift = max ||m_items row||), so exp never overflows and the
    # constant cancels in both normalizations.
    e = jnp.exp(score - shift)                                   # (M, TN), in (0, 1]

    # Softmax over memory slots (per pixel) = sublane-axis softmax.
    rsum = jnp.sum(e, axis=0, keepdims=True)                     # (1, TN)
    sm = e * pl.reciprocal(rsum, approx=True)                    # (M, TN)

    # 1x1 output conv (pre-BN):  y = Wq @ qn + (Wm @ m_items^T) @ sm
    y = y_q + jnp.dot(wm_mem, sm, preferred_element_type=jnp.float32)   # (C, TN)
    return e, sm, y


def _stats_kernel(hw, tn, q_ref, w1_ref, wm_mem_ref, shift_ref,
                  csum_ref, ysum_ref, ysq_ref):
    c = q_ref.shape[0]
    e, _, y = _compute_tile(q_ref[...], w1_ref[...], wm_mem_ref[...], shift_ref[0], c)
    if hw % tn != 0:  # padded pixels exist in the last tile: mask them out of the stats
        lane = lax.broadcasted_iota(jnp.int32, (1, tn), 1)
        valid = (pl.program_id(1) * tn + lane) < hw
        e = jnp.where(valid, e, 0.0)
        y = jnp.where(valid, y, 0.0)
    csum_ref[...] = jnp.sum(e, axis=1, keepdims=True)            # (M, 1) exp column sums
    ysum_ref[...] = jnp.sum(y, axis=1, keepdims=True)            # (C, 1) BN sum
    ysq_ref[...] = jnp.sum(y * y, axis=1, keepdims=True)         # (C, 1) BN sum of squares


def _output_kernel(q_ref, w1_ref, wm_mem_ref, shift_ref, a_ref, b_ref, cinv_ref,
                   out_ref, sq_ref, sm_ref):
    c = q_ref.shape[0]
    e, sm, y = _compute_tile(q_ref[...], w1_ref[...], wm_mem_ref[...], shift_ref[0], c)
    # Fused training-mode BatchNorm (scale/shift precomputed from batch stats) + ReLU.
    out_ref[...] = jnp.maximum(y * a_ref[...] + b_ref[...], 0.0)
    # Softmax over all pixels per memory slot: shared exp * global per-slot reciprocal.
    sq_ref[...] = e * cinv_ref[...]
    # Softmax over memory slots per pixel.
    sm_ref[...] = sm


@jax.jit
def _memory_read(params, query):
    m_items = params["m_items"]
    w_out = params["w_out"]
    B, C, H, W = query.shape
    M = m_items.shape[0]
    HW = H * W

    q3 = query.reshape(B, C, HW)             # channels -> sublanes, pixels -> lanes

    # Tile the pixel axis (full extent if small, else multiples of TILE_N with pad).
    if HW <= TILE_N:
        tn, hw_pad = HW, HW
    else:
        tn = TILE_N
        hw_pad = pl.cdiv(HW, tn) * tn
        if hw_pad != HW:
            q3 = jnp.pad(q3, ((0, 0), (0, 0), (0, hw_pad - HW)))
    nt = hw_pad // tn

    wq = w_out[:, :C]                         # conv half acting on the normalized query
    wm = w_out[:, C:]                         # conv half acting on the memory readout
    w1 = jnp.concatenate([wq, m_items], axis=0)              # (C+M, C) stacked MXU operand
    wm_mem = wm @ m_items.T                                   # (C, M) tiny precomputed matmul
    # Global score upper bound (||qn|| <= 1) -> safe shared-exp softmax across tiles.
    shift = jnp.max(jnp.sqrt(jnp.sum(m_items * m_items, axis=1))).reshape(1)

    q_spec = pl.BlockSpec((None, C, tn), lambda b, t: (b, 0, t))
    smem_spec = pl.BlockSpec(memory_space=pltpu.MemorySpace.SMEM)

    def small_spec(shape):
        return pl.BlockSpec(shape, lambda b, t: (0, 0))

    def part_spec(rows):
        return pl.BlockSpec((None, None, rows, 1), lambda b, t: (b, t, 0, 0))

    # ---- sweep 1: tiny per-tile partial sums only (no big intermediates to HBM) ----
    csum_p, ysum_p, ysq_p = pl.pallas_call(
        functools.partial(_stats_kernel, HW, tn),
        grid=(B, nt),
        in_specs=[q_spec, small_spec((C + M, C)), small_spec((C, M)), smem_spec],
        out_specs=[part_spec(M), part_spec(C), part_spec(C)],
        out_shape=[
            jax.ShapeDtypeStruct((B, nt, M, 1), jnp.float32),   # per-tile exp column sums
            jax.ShapeDtypeStruct((B, nt, C, 1), jnp.float32),   # per-tile y sums
            jax.ShapeDtypeStruct((B, nt, C, 1), jnp.float32),   # per-tile y^2 sums
        ],
        compiler_params=pltpu.CompilerParams(
            dimension_semantics=("parallel", "parallel")),
    )(q3, w1, wm_mem, shift)

    # Tiny cross-tile reductions + fused BN coefficients (training-mode batch stats,
    # matching the PyTorch module's default .train() state).
    n_total = float(B * HW)
    colsum = jnp.sum(csum_p, axis=(0, 1))                       # (M, 1)
    mean = jnp.sum(ysum_p, axis=(0, 1)) / n_total               # (C, 1)
    var = jnp.sum(ysq_p, axis=(0, 1)) / n_total - mean * mean   # biased batch variance
    bn_a = params["bn_gamma"].reshape(C, 1) * lax.rsqrt(var + BN_EPS)
    bn_b = params["bn_beta"].reshape(C, 1) - mean * bn_a
    c_inv = 1.0 / colsum                                        # (M, 1)

    # ---- sweep 2: recompute tile math, write final outputs (lane-dense blocks) ----
    out3, sq_out, sm_out = pl.pallas_call(
        _output_kernel,
        grid=(B, nt),
        in_specs=[q_spec, small_spec((C + M, C)), small_spec((C, M)), smem_spec,
                  small_spec((C, 1)), small_spec((C, 1)), small_spec((M, 1))],
        out_specs=[
            pl.BlockSpec((None, C, tn), lambda b, t: (b, 0, t)),
            pl.BlockSpec((None, M, tn), lambda b, t: (b, 0, t)),
            pl.BlockSpec((None, M, tn), lambda b, t: (b, 0, t)),
        ],
        out_shape=[
            jax.ShapeDtypeStruct((B, C, hw_pad), jnp.float32),  # relu(bn(conv))
            jax.ShapeDtypeStruct((B, M, hw_pad), jnp.float32),  # softmax_score_query
            jax.ShapeDtypeStruct((B, M, hw_pad), jnp.float32),  # softmax_score_memory
        ],
        compiler_params=pltpu.CompilerParams(
            dimension_semantics=("parallel", "parallel")),
    )(q3, w1, wm_mem, shift, bn_a, bn_b, c_inv)

    if hw_pad != HW:
        out3 = out3[:, :, :HW]
        sq_out = sq_out[:, :, :HW]
        sm_out = sm_out[:, :, :HW]

    updated = out3.reshape(B, C, H, W)
    sq = jnp.transpose(sq_out.reshape(B, M, H, W), (0, 2, 3, 1))
    sm = jnp.transpose(sm_out.reshape(B, M, H, W), (0, 2, 3, 1))
    return updated, sq, sm


def memory_sup_forward(params, query, mask=None, memory_writing=False):
    """Memory_sup.forward for the reachable no-mask configuration (read path).

    query: NCHW float32.
    Returns (updated_query NCHW, softmax_score_query (B,H,W,19),
             softmax_score_memory (B,H,W,19), readloss, writeloss).
    """
    # TODO(synk): the memory-writing branch (Writingnet conv+BN residual update,
    # one-hot mask bilinear interpolation, CE read/classification losses and the
    # diversity loss) is only reachable when a segmentation mask is supplied and is
    # not implemented here; gumbel_softmax read is likewise not implemented.
    assert mask is None and not memory_writing
    updated, sq, sm = _memory_read(params, query)
    return updated, sq, sm, 0.0, [0.0, 0.0]


def init_params(key):
    k_mem, k_conv = jax.random.split(key)
    # m_items = F.normalize(rand(M, D), dim=1)
    m = jax.random.uniform(k_mem, (MEMORY_SIZE, FEATURE_DIM), jnp.float32)
    m = m / jnp.maximum(jnp.linalg.norm(m, axis=1, keepdims=True), NORM_EPS)
    # output conv: Conv2d(2*D -> D, 1x1, bias=False), kaiming_normal_(relu)
    fan_in = 2 * FEATURE_DIM
    std = (2.0 / fan_in) ** 0.5
    w_out = std * jax.random.normal(k_conv, (FEATURE_DIM, 2 * FEATURE_DIM), jnp.float32)
    # BatchNorm2d: weight=1.0, bias=0.0001 (initialize_weights)
    bn_gamma = jnp.ones((FEATURE_DIM,), jnp.float32)
    bn_beta = jnp.full((FEATURE_DIM,), 1e-4, jnp.float32)
    return {"m_items": m, "w_out": w_out, "bn_gamma": bn_gamma, "bn_beta": bn_beta}


if __name__ == "__main__":
    key = jax.random.PRNGKey(0)
    k_param, k_q = jax.random.split(key)
    params = init_params(k_param)

    B, C, H, W = 2, FEATURE_DIM, 8, 8          # small NCHW query
    query = jax.random.normal(k_q, (B, C, H, W), dtype=jnp.float32)

    updated, sq, sm, readloss, writeloss = memory_sup_forward(
        params, query, mask=None, memory_writing=False)
    jax.block_until_ready((updated, sq, sm))

    assert updated.shape == (B, C, H, W)
    assert sq.shape == (B, H, W, MEMORY_SIZE)
    assert sm.shape == (B, H, W, MEMORY_SIZE)
    assert bool(jnp.all(jnp.isfinite(updated)))
    assert bool(jnp.all(jnp.isfinite(sq))) and bool(jnp.all(jnp.isfinite(sm)))
    # per-pixel softmax over memory slots sums to 1 (approx reciprocal -> loose tol)
    assert bool(jnp.max(jnp.abs(jnp.sum(sm, axis=-1) - 1.0)) < 1e-2)
    # per-slot softmax over all pixels (and batch) sums to 1
    assert bool(jnp.max(jnp.abs(jnp.sum(sq, axis=(0, 1, 2)) - 1.0)) < 1e-2)
    print("KERNEL_OK")
</pallas_src>

<mosaic_0001>
module attributes {stable_mosaic.version = 11 : i64} {
  func.func @_stats_kernel(%arg0: i32, %arg1: i32, %arg2: memref<1x32x64xf32, #tpu.memory_space<vmem>>, %arg3: memref<51x32xf32, #tpu.memory_space<vmem>>, %arg4: memref<32x19xf32, #tpu.memory_space<vmem>>, %arg5: memref<1xf32, #tpu.memory_space<smem>>, %arg6: memref<1x1x19x1xf32, #tpu.memory_space<vmem>>, %arg7: memref<1x1x32x1xf32, #tpu.memory_space<vmem>>, %arg8: memref<1x1x32x1xf32, #tpu.memory_space<vmem>>) attributes {dimension_semantics = [#tpu.dimension_semantics<parallel>, #tpu.dimension_semantics<parallel>], iteration_bounds = array<i64: 2, 1>, scalar_prefetch = 0 : i64, scratch_operands = 0 : i64, tpu.core_type = #tpu.core_type<tc>, window_params = [{transform_indices = @transform_0, window_bounds = array<i64: 1, 32, 64>}, {pipeline_mode = #tpu.pipeline_mode<synchronous>, transform_indices = @transform_1, window_bounds = array<i64: 51, 32>}, {pipeline_mode = #tpu.pipeline_mode<synchronous>, transform_indices = @transform_2, window_bounds = array<i64: 32, 19>}, {transform_indices = @transform_3, window_bounds = array<i64: 1>}, {transform_indices = @transform_4, window_bounds = array<i64: 1, 1, 19, 1>}, {transform_indices = @transform_5, window_bounds = array<i64: 1, 1, 32, 1>}, {transform_indices = @transform_6, window_bounds = array<i64: 1, 1, 32, 1>}]} {
    %c0 = arith.constant 0 : index
    %c0_0 = arith.constant 0 : index
    %c0_1 = arith.constant 0 : index
    %0 = vector.load %arg2[%c0, %c0_0, %c0_1] : memref<1x32x64xf32, #tpu.memory_space<vmem>>, vector<1x32x64xf32>
    %1 = vector.shape_cast %0 : vector<1x32x64xf32> to vector<32x64xf32>
    %c0_2 = arith.constant 0 : index
    %c0_3 = arith.constant 0 : index
    %2 = vector.load %arg3[%c0_2, %c0_3] : memref<51x32xf32, #tpu.memory_space<vmem>>, vector<51x32xf32>
    %c0_4 = arith.constant 0 : index
    %c0_5 = arith.constant 0 : index
    %3 = vector.load %arg4[%c0_4, %c0_5] : memref<32x19xf32, #tpu.memory_space<vmem>>, vector<32x19xf32>
    %c0_6 = arith.constant 0 : index
    %4 = memref.load %arg5[%c0_6] : memref<1xf32, #tpu.memory_space<smem>>
    %5 = arith.mulf %1, %1 : vector<32x64xf32>
    %cst = arith.constant dense<0.000000e+00> : vector<64xf32>
    %6 = vector.multi_reduction <add>, %5, %cst [0] : vector<32x64xf32> to vector<64xf32>
    %7 = vector.shape_cast %6 : vector<64xf32> to vector<1x64xf32>
    %cst_7 = arith.constant 1.000000e-24 : f32
    %8 = vector.broadcast %cst_7 : f32 to vector<1x64xf32>
    %9 = arith.maximumf %7, %8 : vector<1x64xf32>
    %10 = math.rsqrt %9 : vector<1x64xf32>
    %11 = vector.broadcast %10 : vector<1x64xf32> to vector<32x64xf32>
    %12 = arith.mulf %1, %11 : vector<32x64xf32>
    %cst_8 = arith.constant dense<0.000000e+00> : vector<51x64xf32>
    %13 = tpu.matmul %2, %12, %cst_8 {dimension_numbers = #tpu.dot_dimension_numbers<[1], [0], [0], [1], [0, 0, 1, 1], [], []>} : vector<51x32xf32>, vector<32x64xf32>, vector<51x64xf32> -> vector<51x64xf32>
    %14 = vector.extract_strided_slice %13 {offsets = [0, 0], sizes = [32, 64], strides = [1, 1]} : vector<51x64xf32> to vector<32x64xf32>
    %15 = vector.extract_strided_slice %13 {offsets = [32, 0], sizes = [19, 64], strides = [1, 1]} : vector<51x64xf32> to vector<19x64xf32>
    %16 = vector.broadcast %4 : f32 to vector<19x64xf32>
    %17 = arith.subf %15, %16 : vector<19x64xf32>
    %18 = math.exp %17 : vector<19x64xf32>
    %cst_9 = arith.constant dense<0.000000e+00> : vector<64xf32>
    %19 = vector.multi_reduction <add>, %18, %cst_9 [0] : vector<19x64xf32> to vector<64xf32>
    %20 = vector.shape_cast %19 : vector<64xf32> to vector<1x64xf32>
    %21 = tpu.reciprocal %20 {approx = true} : vector<1x64xf32> -> vector<1x64xf32>
    %22 = vector.broadcast %21 : vector<1x64xf32> to vector<19x64xf32>
    %23 = arith.mulf %18, %22 : vector<19x64xf32>
    %cst_10 = arith.constant dense<0.000000e+00> : vector<32x64xf32>
    %24 = tpu.matmul %3, %23, %cst_10 {dimension_numbers = #tpu.dot_dimension_numbers<[1], [0], [0], [1], [0, 0, 1, 1], [], []>} : vector<32x19xf32>, vector<19x64xf32>, vector<32x64xf32> -> vector<32x64xf32>
    %25 = arith.addf %14, %24 : vector<32x64xf32>
    %cst_11 = arith.constant dense<0.000000e+00> : vector<19xf32>
    %26 = vector.multi_reduction <add>, %18, %cst_11 [1] : vector<19x64xf32> to vector<19xf32>
    %27 = vector.shape_cast %26 : vector<19xf32> to vector<19x1xf32>
    %c0_12 = arith.constant 0 : index
    %c0_13 = arith.constant 0 : index
    %c0_14 = arith.constant 0 : index
    %c0_15 = arith.constant 0 : index
    %28 = vector.load %arg6[%c0_12, %c0_13, %c0_14, %c0_15] : memref<1x1x19x1xf32, #tpu.memory_space<vmem>>, vector<1x1x19x1xf32>
    %29 = vector.shape_cast %28 : vector<1x1x19x1xf32> to vector<19x1xf32>
    %30 = vector.shape_cast %27 : vector<19x1xf32> to vector<1x1x19x1xf32>
    tpu.vector_store %arg6[%c0_12, %c0_13, %c0_14, %c0_15], %30 {strides = array<i32>} : memref<1x1x19x1xf32, #tpu.memory_space<vmem>>, vector<1x1x19x1xf32>,
    %cst_16 = arith.constant dense<0.000000e+00> : vector<32xf32>
    %31 = vector.multi_reduction <add>, %25, %cst_16 [1] : vector<32x64xf32> to vector<32xf32>
    %32 = vector.shape_cast %31 : vector<32xf32> to vector<32x1xf32>
    %c0_17 = arith.constant 0 : index
    %c0_18 = arith.constant 0 : index
    %c0_19 = arith.constant 0 : index
    %c0_20 = arith.constant 0 : index
    %33 = vector.load %arg7[%c0_17, %c0_18, %c0_19, %c0_20] : memref<1x1x32x1xf32, #tpu.memory_space<vmem>>, vector<1x1x32x1xf32>
    %34 = vector.shape_cast %33 : vector<1x1x32x1xf32> to vector<32x1xf32>
    %35 = vector.shape_cast %32 : vector<32x1xf32> to vector<1x1x32x1xf32>
    tpu.vector_store %arg7[%c0_17, %c0_18, %c0_19, %c0_20], %35 {strides = array<i32>} : memref<1x1x32x1xf32, #tpu.memory_space<vmem>>, vector<1x1x32x1xf32>,
    %36 = arith.mulf %25, %25 : vector<32x64xf32>
    %cst_21 = arith.constant dense<0.000000e+00> : vector<32xf32>
    %37 = vector.multi_reduction <add>, %36, %cst_21 [1] : vector<32x64xf32> to vector<32xf32>
    %38 = vector.shape_cast %37 : vector<32xf32> to vector<32x1xf32>
    %c0_22 = arith.constant 0 : index
    %c0_23 = arith.constant 0 : index
    %c0_24 = arith.constant 0 : index
    %c0_25 = arith.constant 0 : index
    %39 = vector.load %arg8[%c0_22, %c0_23, %c0_24, %c0_25] : memref<1x1x32x1xf32, #tpu.memory_space<vmem>>, vector<1x1x32x1xf32>
    %40 = vector.shape_cast %39 : vector<1x1x32x1xf32> to vector<32x1xf32>
    %41 = vector.shape_cast %38 : vector<32x1xf32> to vector<1x1x32x1xf32>
    tpu.vector_store %arg8[%c0_22, %c0_23, %c0_24, %c0_25], %41 {strides = array<i32>} : memref<1x1x32x1xf32, #tpu.memory_space<vmem>>, vector<1x1x32x1xf32>,
    return
  }
  func.func @transform_0(%arg0: i32, %arg1: i32) -> (i32, i32, i32) {
    %c0_i32 = arith.constant 0 : i32
    %c0_i32_0 = arith.constant 0 : i32
    return %arg0, %c0_i32, %arg1 : i32, i32, i32
  }
  func.func @transform_1(%arg0: i32, %arg1: i32) -> (i32, i32) {
    %c0_i32 = arith.constant 0 : i32
    %c0_i32_0 = arith.constant 0 : i32
    %c0_i32_1 = arith.constant 0 : i32
    return %c0_i32, %c0_i32_0 : i32, i32
  }
  func.func @transform_2(%arg0: i32, %arg1: i32) -> (i32, i32) {
    %c0_i32 = arith.constant 0 : i32
    %c0_i32_0 = arith.constant 0 : i32
    %c0_i32_1 = arith.constant 0 : i32
    return %c0_i32, %c0_i32_0 : i32, i32
  }
  func.func @transform_3(%arg0: i32, %arg1: i32) -> i32 {
    %c0_i32 = arith.constant 0 : i32
    %c0_i32_0 = arith.constant 0 : i32
    return %c0_i32 : i32
  }
  func.func @transform_4(%arg0: i32, %arg1: i32) -> (i32, i32, i32, i32) {
    %c0_i32 = arith.constant 0 : i32
    %c0_i32_0 = arith.constant 0 : i32
    %c0_i32_1 = arith.constant 0 : i32
    return %arg0, %arg1, %c0_i32, %c0_i32_0 : i32, i32, i32, i32
  }
  func.func @transform_5(%arg0: i32, %arg1: i32) -> (i32, i32, i32, i32) {
    %c0_i32 = arith.constant 0 : i32
    %c0_i32_0 = arith.constant 0 : i32
    %c0_i32_1 = arith.constant 0 : i32
    return %arg0, %arg1, %c0_i32, %c0_i32_0 : i32, i32, i32, i32
  }
  func.func @transform_6(%arg0: i32, %arg1: i32) -> (i32, i32, i32, i32) {
    %c0_i32 = arith.constant 0 : i32
    %c0_i32_0 = arith.constant 0 : i32
    %c0_i32_1 = arith.constant 0 : i32
    return %arg0, %arg1, %c0_i32, %c0_i32_0 : i32, i32, i32, i32
  }
}

module attributes {stable_mosaic.version = 11 : i64} {
  func.func @_output_kernel(%arg0: i32, %arg1: i32, %arg2: memref<1x32x64xf32, #tpu.memory_space<vmem>>, %arg3: memref<51x32xf32, #tpu.memory_space<vmem>>, %arg4: memref<32x19xf32, #tpu.memory_space<vmem>>, %arg5: memref<1xf32, #tpu.memory_space<smem>>, %arg6: memref<32x1xf32, #tpu.memory_space<vmem>>, %arg7: memref<32x1xf32, #tpu.memory_space<vmem>>, %arg8: memref<19x1xf32, #tpu.memory_space<vmem>>, %arg9: memref<1x32x64xf32, #tpu.memory_space<vmem>>, %arg10: memref<1x19x64xf32, #tpu.memory_space<vmem>>, %arg11: memref<1x19x64xf32, #tpu.memory_space<vmem>>) attributes {dimension_semantics = [#tpu.dimension_semantics<parallel>, #tpu.dimension_semantics<parallel>], iteration_bounds = array<i64: 2, 1>, scalar_prefetch = 0 : i64, scratch_operands = 0 : i64, tpu.core_type = #tpu.core_type<tc>, window_params = [{transform_indices = @transform_0, window_bounds = array<i64: 1, 32, 64>}, {pipeline_mode = #tpu.pipeline_mode<synchronous>, transform_indices = @transform_1, window_bounds = array<i64: 51, 32>}, {pipeline_mode = #tpu.pipeline_mode<synchronous>, transform_indices = @transform_2, window_bounds = array<i64: 32, 19>}, {transform_indices = @transform_3, window_bounds = array<i64: 1>}, {pipeline_mode = #tpu.pipeline_mode<synchronous>, transform_indices = @transform_4, window_bounds = array<i64: 32, 1>}, {pipeline_mode = #tpu.pipeline_mode<synchronous>, transform_indices = @transform_5, window_bounds = array<i64: 32, 1>}, {pipeline_mode = #tpu.pipeline_mode<synchronous>, transform_indices = @transform_6, window_bounds = array<i64: 19, 1>}, {transform_indices = @transform_7, window_bounds = array<i64: 1, 32, 64>}, {transform_indices = @transform_8, window_bounds = array<i64: 1, 19, 64>}, {transform_indices = @transform_9, window_bounds = array<i64: 1, 19, 64>}]} {
    %c0 = arith.constant 0 : index
    %c0_0 = arith.constant 0 : index
    %c0_1 = arith.constant 0 : index
    %0 = vector.load %arg2[%c0, %c0_0, %c0_1] : memref<1x32x64xf32, #tpu.memory_space<vmem>>, vector<1x32x64xf32>
    %1 = vector.shape_cast %0 : vector<1x32x64xf32> to vector<32x64xf32>
    %c0_2 = arith.constant 0 : index
    %c0_3 = arith.constant 0 : index
    %2 = vector.load %arg3[%c0_2, %c0_3] : memref<51x32xf32, #tpu.memory_space<vmem>>, vector<51x32xf32>
    %c0_4 = arith.constant 0 : index
    %c0_5 = arith.constant 0 : index
    %3 = vector.load %arg4[%c0_4, %c0_5] : memref<32x19xf32, #tpu.memory_space<vmem>>, vector<32x19xf32>
    %c0_6 = arith.constant 0 : index
    %4 = memref.load %arg5[%c0_6] : memref<1xf32, #tpu.memory_space<smem>>
    %5 = arith.mulf %1, %1 : vector<32x64xf32>
    %cst = arith.constant dense<0.000000e+00> : vector<64xf32>
    %6 = vector.multi_reduction <add>, %5, %cst [0] : vector<32x64xf32> to vector<64xf32>
    %7 = vector.shape_cast %6 : vector<64xf32> to vector<1x64xf32>
    %cst_7 = arith.constant 1.000000e-24 : f32
    %8 = vector.broadcast %cst_7 : f32 to vector<1x64xf32>
    %9 = arith.maximumf %7, %8 : vector<1x64xf32>
    %10 = math.rsqrt %9 : vector<1x64xf32>
    %11 = vector.broadcast %10 : vector<1x64xf32> to vector<32x64xf32>
    %12 = arith.mulf %1, %11 : vector<32x64xf32>
    %cst_8 = arith.constant dense<0.000000e+00> : vector<51x64xf32>
    %13 = tpu.matmul %2, %12, %cst_8 {dimension_numbers = #tpu.dot_dimension_numbers<[1], [0], [0], [1], [0, 0, 1, 1], [], []>} : vector<51x32xf32>, vector<32x64xf32>, vector<51x64xf32> -> vector<51x64xf32>
    %14 = vector.extract_strided_slice %13 {offsets = [0, 0], sizes = [32, 64], strides = [1, 1]} : vector<51x64xf32> to vector<32x64xf32>
    %15 = vector.extract_strided_slice %13 {offsets = [32, 0], sizes = [19, 64], strides = [1, 1]} : vector<51x64xf32> to vector<19x64xf32>
    %16 = vector.broadcast %4 : f32 to vector<19x64xf32>
    %17 = arith.subf %15, %16 : vector<19x64xf32>
    %18 = math.exp %17 : vector<19x64xf32>
    %cst_9 = arith.constant dense<0.000000e+00> : vector<64xf32>
    %19 = vector.multi_reduction <add>, %18, %cst_9 [0] : vector<19x64xf32> to vector<64xf32>
    %20 = vector.shape_cast %19 : vector<64xf32> to vector<1x64xf32>
    %21 = tpu.reciprocal %20 {approx = true} : vector<1x64xf32> -> vector<1x64xf32>
    %22 = vector.broadcast %21 : vector<1x64xf32> to vector<19x64xf32>
    %23 = arith.mulf %18, %22 : vector<19x64xf32>
    %cst_10 = arith.constant dense<0.000000e+00> : vector<32x64xf32>
    %24 = tpu.matmul %3, %23, %cst_10 {dimension_numbers = #tpu.dot_dimension_numbers<[1], [0], [0], [1], [0, 0, 1, 1], [], []>} : vector<32x19xf32>, vector<19x64xf32>, vector<32x64xf32> -> vector<32x64xf32>
    %25 = arith.addf %14, %24 : vector<32x64xf32>
    %c0_11 = arith.constant 0 : index
    %c0_12 = arith.constant 0 : index
    %26 = vector.load %arg6[%c0_11, %c0_12] : memref<32x1xf32, #tpu.memory_space<vmem>>, vector<32x1xf32>
    %27 = vector.broadcast %26 : vector<32x1xf32> to vector<32x64xf32>
    %28 = arith.mulf %25, %27 : vector<32x64xf32>
    %c0_13 = arith.constant 0 : index
    %c0_14 = arith.constant 0 : index
    %29 = vector.load %arg7[%c0_13, %c0_14] : memref<32x1xf32, #tpu.memory_space<vmem>>, vector<32x1xf32>
    %30 = vector.broadcast %29 : vector<32x1xf32> to vector<32x64xf32>
    %31 = arith.addf %28, %30 : vector<32x64xf32>
    %cst_15 = arith.constant 0.000000e+00 : f32
    %32 = vector.broadcast %cst_15 : f32 to vector<32x64xf32>
    %33 = arith.maximumf %31, %32 : vector<32x64xf32>
    %c0_16 = arith.constant 0 : index
    %c0_17 = arith.constant 0 : index
    %c0_18 = arith.constant 0 : index
    %34 = vector.load %arg9[%c0_16, %c0_17, %c0_18] : memref<1x32x64xf32, #tpu.memory_space<vmem>>, vector<1x32x64xf32>
    %35 = vector.shape_cast %34 : vector<1x32x64xf32> to vector<32x64xf32>
    %36 = vector.shape_cast %33 : vector<32x64xf32> to vector<1x32x64xf32>
    tpu.vector_store %arg9[%c0_16, %c0_17, %c0_18], %36 {strides = array<i32>} : memref<1x32x64xf32, #tpu.memory_space<vmem>>, vector<1x32x64xf32>,
    %c0_19 = arith.constant 0 : index
    %c0_20 = arith.constant 0 : index
    %37 = vector.load %arg8[%c0_19, %c0_20] : memref<19x1xf32, #tpu.memory_space<vmem>>, vector<19x1xf32>
    %38 = vector.broadcast %37 : vector<19x1xf32> to vector<19x64xf32>
    %39 = arith.mulf %18, %38 : vector<19x64xf32>
    %c0_21 = arith.constant 0 : index
    %c0_22 = arith.constant 0 : index
    %c0_23 = arith.constant 0 : index
    %40 = vector.load %arg10[%c0_21, %c0_22, %c0_23] : memref<1x19x64xf32, #tpu.memory_space<vmem>>, vector<1x19x64xf32>
    %41 = vector.shape_cast %40 : vector<1x19x64xf32> to vector<19x64xf32>
    %42 = vector.shape_cast %39 : vector<19x64xf32> to vector<1x19x64xf32>
    tpu.vector_store %arg10[%c0_21, %c0_22, %c0_23], %42 {strides = array<i32>} : memref<1x19x64xf32, #tpu.memory_space<vmem>>, vector<1x19x64xf32>,
    %c0_24 = arith.constant 0 : index
    %c0_25 = arith.constant 0 : index
    %c0_26 = arith.constant 0 : index
    %43 = vector.load %arg11[%c0_24, %c0_25, %c0_26] : memref<1x19x64xf32, #tpu.memory_space<vmem>>, vector<1x19x64xf32>
    %44 = vector.shape_cast %43 : vector<1x19x64xf32> to vector<19x64xf32>
    %45 = vector.shape_cast %23 : vector<19x64xf32> to vector<1x19x64xf32>
    tpu.vector_store %arg11[%c0_24, %c0_25, %c0_26], %45 {strides = array<i32>} : memref<1x19x64xf32, #tpu.memory_space<vmem>>, vector<1x19x64xf32>,
    return
  }
  func.func @transform_0(%arg0: i32, %arg1: i32) -> (i32, i32, i32) {
    %c0_i32 = arith.constant 0 : i32
    %c0_i32_0 = arith.constant 0 : i32
    return %arg0, %c0_i32, %arg1 : i32, i32, i32
  }
  func.func @transform_1(%arg0: i32, %arg1: i32) -> (i32, i32) {
    %c0_i32 = arith.constant 0 : i32
    %c0_i32_0 = arith.constant 0 : i32
    %c0_i32_1 = arith.constant 0 : i32
    return %c0_i32, %c0_i32_0 : i32, i32
  }
  func.func @transform_2(%arg0: i32, %arg1: i32) -> (i32, i32) {
    %c0_i32 = arith.constant 0 : i32
    %c0_i32_0 = arith.constant 0 : i32
    %c0_i32_1 = arith.constant 0 : i32
    return %c0_i32, %c0_i32_0 : i32, i32
  }
  func.func @transform_3(%arg0: i32, %arg1: i32) -> i32 {
    %c0_i32 = arith.constant 0 : i32
    %c0_i32_0 = arith.constant 0 : i32
    return %c0_i32 : i32
  }
  func.func @transform_4(%arg0: i32, %arg1: i32) -> (i32, i32) {
    %c0_i32 = arith.constant 0 : i32
    %c0_i32_0 = arith.constant 0 : i32
    %c0_i32_1 = arith.constant 0 : i32
    return %c0_i32, %c0_i32_0 : i32, i32
  }
  func.func @transform_5(%arg0: i32, %arg1: i32) -> (i32, i32) {
    %c0_i32 = arith.constant 0 : i32
    %c0_i32_0 = arith.constant 0 : i32
    %c0_i32_1 = arith.constant 0 : i32
    return %c0_i32, %c0_i32_0 : i32, i32
  }
  func.func @transform_6(%arg0: i32, %arg1: i32) -> (i32, i32) {
    %c0_i32 = arith.constant 0 : i32
    %c0_i32_0 = arith.constant 0 : i32
    %c0_i32_1 = arith.constant 0 : i32
    return %c0_i32, %c0_i32_0 : i32, i32
  }
  func.func @transform_7(%arg0: i32, %arg1: i32) -> (i32, i32, i32) {
    %c0_i32 = arith.constant 0 : i32
    %c0_i32_0 = arith.constant 0 : i32
    return %arg0, %c0_i32, %arg1 : i32, i32, i32
  }
  func.func @transform_8(%arg0: i32, %arg1: i32) -> (i32, i32, i32) {
    %c0_i32 = arith.constant 0 : i32
    %c0_i32_0 = arith.constant 0 : i32
    return %arg0, %c0_i32, %arg1 : i32, i32, i32
  }
  func.func @transform_9(%arg0: i32, %arg1: i32) -> (i32, i32, i32) {
    %c0_i32 = arith.constant 0 : i32
    %c0_i32_0 = arith.constant 0 : i32
    return %arg0, %c0_i32, %arg1 : i32, i32, i32
  }
}

</mosaic_0001>

<llo_original>
// kernel: _memory_read.2
$region0: #{_memory_read.2}
  #allocation0 [shape = 'u32[]', space=smem, size = 0x4, offset = 0x4, fixed_abs, tag = 'smem constant byte address 0x4 - core index']
  #allocation1 [shape = 'u32[144,128]{1,0:T(1,128)}', space=vmem, size = 0x12000, scoped, tag = 'internal scratch']
  #allocation2 [shape = 'f32[1]{0:T(128)S(6)}', space=smem, size = 0x200, scoped, tag = 'scoped memory for _memory_read.2']
  %s0 = inlined_call_operand.vmem [shape: f32[2,32,64], index: 0, kind: input, shape index: {}]
  %s1 = inlined_call_operand.vmem [shape: f32[51,32], index: 1, kind: input, shape index: {}]
  %s2 = inlined_call_operand.vmem [shape: f32[32,19], index: 2, kind: input, shape index: {}]
  %s3 = inlined_call_operand.<no memory space> [shape: f32[1], index: 3, kind: input, shape index: {}]
  %s4 = inlined_call_operand.vmem [shape: f32[2,1,19,1], index: 4, kind: output, shape index: {0}]
  %s5 = inlined_call_operand.vmem [shape: f32[2,1,32,1], index: 5, kind: output, shape index: {1}]
  %s6 = inlined_call_operand.vmem [shape: f32[2,1,32,1], index: 6, kind: output, shape index: {2}]
  %7 = xla_tuple %s4, %s5, %s6
  %s8 = sld [smem:[#allocation0]]
  $region65: #{_memory_read.2} parent=0
    _
  %s10 = ssub.s32 1, %s8
  %s11 = scalar_select 0, %s10, %s8
  %12 = sst [smem:[#allocation2]] %s3
  loop: start=0, step=1, limit=4
  $region2: #{_memory_read.2} parent=0 // loop_pre_header
    _
  $region3: #{_memory_read.2} parent=0 // loop_header
    %s14 = sphi 0, %s18
    %p15 = scmp.ge.s32.totalorder %s14, 4
    %s21 = sphi 0, %s33
    %s22 = sphi 0, %s29
    %s23 = sphi 0, %s21
    %s24 = sphi 0, %s22
    %s25 = sphi 0, %s23
    %s26 = sphi 0, %s24
    %s38 = sphi 0, %s40
    %s41 = sphi 0, %s38
    %s42 = sphi 0, %s41
    %s58 = sphi 0, %s42
    %s62 = sphi 0, %s62
    %s64 = sphi 0, %s62
    %s65 = sphi 0, %s64
    %s79 = sphi 0, %s65
    %s83 = sphi 0, %s83
    %s85 = sphi 0, %s83
    %s86 = sphi 0, %s85
    %s100 = sphi 0, %s86
    %s104 = sphi 0, %s104
    %s106 = sphi 0, %s104
    %s107 = sphi 0, %s106
    %s121 = sphi 0, %s107
    %s129 = sphi 0, %s131
    %s132 = sphi 0, %s129
    %s133 = sphi 0, %s132
    %s149 = sphi 0, %s133
    %s157 = sphi 0, %s159
    %s160 = sphi 0, %s157
    %s161 = sphi 0, %s160
    %s177 = sphi 0, %s161
    %s185 = sphi 0, %s187
    %s188 = sphi 0, %s185
    %s189 = sphi 0, %s188
    %s205 = sphi 0, %s189
  $region4: #{_memory_read.2} parent=0 // loop_header_branch
    %17 = sbr.rel (%p15) target = $region8
  $region5: #{_memory_read.2} parent=0 // loop_body
    %s19 = ssub.s32 %s14, 1
    %s20 = ssub.s32 %s14, 2
    %s27 = sadd.s32 1, %s22
    %p28 = scmp.ge.s32.totalorder %s27, 1
    %s29 = scalar_select %p28, 0, %s27
    %s30 = sadd.s32 1, %s21
    %s31 = scalar_select %p28, %s30, %s21
    %p32 = scmp.ge.s32.totalorder %s31, 2
    %s33 = scalar_select %p32, 0, %s31
    %s34 = ssub.s32 %s21, %s33
    %s35 = ssub.s32 %s22, %s29
    %s36 = sor.u32 %s34, %s35
    %p37 = scmp.eq.s32.totalorder %s36, 0
    %s39 = sadd.s32 %s38, 1
    %s40 = scalar_select %p37, %s38, %s39
    %p43 = pneg %p37
    %p44 = scmp.eq.s32.totalorder %s14, 1
    %p45 = por %p43, %p44
    %p46 = scmp.ne.s32.totalorder %s38, %s41
    %p47 = scmp.eq.s32.totalorder %s14, 0
    %p48 = por %p46, %p47
    %p49 = scmp.ne.s32.totalorder %s38, %s41
    %p50 = scmp.eq.s32.totalorder %s19, 1
    %p51 = por %p49, %p50
    %p52 = scmp.ne.s32.totalorder %s41, %s42
    %p53 = scmp.eq.s32.totalorder %s19, 0
    %p54 = por %p52, %p53
    %p55 = scmp.ne.s32.totalorder %s41, %s42
    %p56 = scmp.eq.s32.totalorder %s20, 1
    %p57 = por %p55, %p56
    %p59 = scmp.ne.s32.totalorder %s42, %s58
    %p60 = scmp.eq.s32.totalorder %s20, 0
    %p61 = por %p59, %p60
    %s63 = sadd.s32 %s62, 1
    %p66 = scmp.eq.s32.totalorder %s14, 1
    %p67 = scmp.ne.s32.totalorder %s62, %s64
    %p68 = scmp.eq.s32.totalorder %s14, 0
    %p69 = por %p67, %p68
    %p70 = scmp.ne.s32.totalorder %s62, %s64
    %p71 = scmp.eq.s32.totalorder %s19, 1
    %p72 = por %p70, %p71
    %p73 = scmp.ne.s32.totalorder %s64, %s65
    %p74 = scmp.eq.s32.totalorder %s19, 0
    %p75 = por %p73, %p74
    %p76 = scmp.ne.s32.totalorder %s64, %s65
    %p77 = scmp.eq.s32.totalorder %s20, 1
    %p78 = por %p76, %p77
    %p80 = scmp.ne.s32.totalorder %s65, %s79
    %p81 = scmp.eq.s32.totalorder %s20, 0
    %p82 = por %p80, %p81
    %s84 = sadd.s32 %s83, 1
    %p87 = scmp.eq.s32.totalorder %s14, 1
    %p88 = scmp.ne.s32.totalorder %s83, %s85
    %p89 = scmp.eq.s32.totalorder %s14, 0
    %p90 = por %p88, %p89
    %p91 = scmp.ne.s32.totalorder %s83, %s85
    %p92 = scmp.eq.s32.totalorder %s19, 1
    %p93 = por %p91, %p92
    %p94 = scmp.ne.s32.totalorder %s85, %s86
    %p95 = scmp.eq.s32.totalorder %s19, 0
    %p96 = por %p94, %p95
    %p97 = scmp.ne.s32.totalorder %s85, %s86
    %p98 = scmp.eq.s32.totalorder %s20, 1
    %p99 = por %p97, %p98
    %p101 = scmp.ne.s32.totalorder %s86, %s100
    %p102 = scmp.eq.s32.totalorder %s20, 0
    %p103 = por %p101, %p102
    %s105 = sadd.s32 %s104, 1
    %p108 = scmp.eq.s32.totalorder %s14, 1
    %p109 = scmp.ne.s32.totalorder %s104, %s106
    %p110 = scmp.eq.s32.totalorder %s14, 0
    %p111 = por %p109, %p110
    %p112 = scmp.ne.s32.totalorder %s104, %s106
    %p113 = scmp.eq.s32.totalorder %s19, 1
    %p114 = por %p112, %p113
    %p115 = scmp.ne.s32.totalorder %s106, %s107
    %p116 = scmp.eq.s32.totalorder %s19, 0
    %p117 = por %p115, %p116
    %p118 = scmp.ne.s32.totalorder %s106, %s107
    %p119 = scmp.eq.s32.totalorder %s20, 1
    %p120 = por %p118, %p119
    %p122 = scmp.ne.s32.totalorder %s107, %s121
    %p123 = scmp.eq.s32.totalorder %s20, 0
    %p124 = por %p122, %p123
    %s125 = ssub.s32 %s21, %s33
    %s126 = ssub.s32 %s22, %s29
    %s127 = sor.u32 %s125, %s126
    %p128 = scmp.eq.s32.totalorder %s127, 0
    %s130 = sadd.s32 %s129, 1
    %s131 = scalar_select %p128, %s129, %s130
    %p134 = pneg %p128
    %p135 = scmp.eq.s32.totalorder %s14, 1
    %p136 = por %p134, %p135
    %p137 = scmp.ne.s32.totalorder %s129, %s132
    %p138 = scmp.eq.s32.totalorder %s14, 0
    %p139 = por %p137, %p138
    %p140 = scmp.ne.s32.totalorder %s129, %s132
    %p141 = scmp.eq.s32.totalorder %s19, 1
    %p142 = por %p140, %p141
    %p143 = scmp.ne.s32.totalorder %s132, %s133
    %p144 = scmp.eq.s32.totalorder %s19, 0
    %p145 = por %p143, %p144
    %p146 = scmp.ne.s32.totalorder %s132, %s133
    %p147 = scmp.eq.s32.totalorder %s20, 1
    %p148 = por %p146, %p147
    %p150 = scmp.ne.s32.totalorder %s133, %s149
    %p151 = scmp.eq.s32.totalorder %s20, 0
    %p152 = por %p150, %p151
    %s153 = ssub.s32 %s21, %s33
    %s154 = ssub.s32 %s22, %s29
    %s155 = sor.u32 %s153, %s154
    %p156 = scmp.eq.s32.totalorder %s155, 0
    %s158 = sadd.s32 %s157, 1
    %s159 = scalar_select %p156, %s157, %s158
    %p162 = pneg %p156
    %p163 = scmp.eq.s32.totalorder %s14, 1
    %p164 = por %p162, %p163
    %p165 = scmp.ne.s32.totalorder %s157, %s160
    %p166 = scmp.eq.s32.totalorder %s14, 0
    %p167 = por %p165, %p166
    %p168 = scmp.ne.s32.totalorder %s157, %s160
    %p169 = scmp.eq.s32.totalorder %s19, 1
    %p170 = por %p168, %p169
    %p171 = scmp.ne.s32.totalorder %s160, %s161
    %p172 = scmp.eq.s32.totalorder %s19, 0
    %p173 = por %p171, %p172
    %p174 = scmp.ne.s32.totalorder %s160, %s161
    %p175 = scmp.eq.s32.totalorder %s20, 1
    %p176 = por %p174, %p175
    %p178 = scmp.ne.s32.totalorder %s161, %s177
    %p179 = scmp.eq.s32.totalorder %s20, 0
    %p180 = por %p178, %p179
    %s181 = ssub.s32 %s21, %s33
    %s182 = ssub.s32 %s22, %s29
    %s183 = sor.u32 %s181, %s182
    %p184 = scmp.eq.s32.totalorder %s183, 0
    %s186 = sadd.s32 %s185, 1
    %s187 = scalar_select %p184, %s185, %s186
    %p190 = pneg %p184
    %p191 = scmp.eq.s32.totalorder %s14, 1
    %p192 = por %p190, %p191
    %p193 = scmp.ne.s32.totalorder %s185, %s188
    %p194 = scmp.eq.s32.totalorder %s14, 0
    %p195 = por %p193, %p194
    %p196 = scmp.ne.s32.totalorder %s185, %s188
    %p197 = scmp.eq.s32.totalorder %s19, 1
    %p198 = por %p196, %p197
    %p199 = scmp.ne.s32.totalorder %s188, %s189
    %p200 = scmp.eq.s32.totalorder %s19, 0
    %p201 = por %p199, %p200
    %p202 = scmp.ne.s32.totalorder %s188, %s189
    %p203 = scmp.eq.s32.totalorder %s20, 1
    %p204 = por %p202, %p203
    %p206 = scmp.ne.s32.totalorder %s189, %s205
    %p207 = scmp.eq.s32.totalorder %s20, 0
    %p208 = por %p206, %p207
    %p209 = scmp.le.s32.totalorder 1, %s14
    %p210 = scmp.lt.s32.totalorder %s14, 3
    %p211 = pnand %p209, %p210
    %p212 = pneg %p211
    // Predicated region
    $region9: #{_memory_read.2} parent=5 // pred_check
      _
    $region10: #{_memory_read.2} parent=5 // pred_check_branch
      %214 = sbr.rel (%p211) target = $region12
    $region11: #{_memory_read.2} parent=5 // pred_region
      %s215 = ssub.s32 %s14, 1
      // Predicated region
      $region13: #{_memory_read.2} parent=11 // pred_check
        %p216 = pneg %p75
      $region14: #{_memory_read.2} parent=11 // pred_check_branch
        %218 = sbr.rel (%p216) target = $region16
      $region15: #{_memory_read.2} parent=11 // pred_region
        _
      $region16: #{_memory_read.2} parent=11 // pred_fallthru
        _
      // Predicated region
      $region17: #{_memory_read.2} parent=11 // pred_check
        %p219 = pneg %p96
      $region18: #{_memory_read.2} parent=11 // pred_check_branch
        %221 = sbr.rel (%p219) target = $region20
      $region19: #{_memory_read.2} parent=11 // pred_region
        _
      $region20: #{_memory_read.2} parent=11 // pred_fallthru
        _
      // Predicated region
      $region21: #{_memory_read.2} parent=11 // pred_check
        %p222 = pneg %p117
      $region22: #{_memory_read.2} parent=11 // pred_check_branch
        %224 = sbr.rel (%p222) target = $region24
      $region23: #{_memory_read.2} parent=11 // pred_region
        _
      $region24: #{_memory_read.2} parent=11 // pred_fallthru
        _
    $region12: #{_memory_read.2} parent=5 // pred_fallthru
      _
    %p225 = scmp.lt.s32.totalorder %s14, 2
    // Predicated region
    $region25: #{_memory_read.2} parent=5 // pred_check
      %p226 = pneg %p225
    $region26: #{_memory_read.2} parent=5 // pred_check_branch
      %228 = sbr.rel (%p226) target = $region28
    $region27: #{_memory_read.2} parent=5 // pred_region
      // Predicated region
      $region29: #{_memory_read.2} parent=27 // pred_check
        %p229 = pneg %p48
      $region30: #{_memory_read.2} parent=27 // pred_check_branch
        %231 = sbr.rel (%p229) target = $region32
      $region31: #{_memory_read.2} parent=27 // pred_region
        %p232 = scmp.lt.s32.totalorder %s21, 1
        %s233 = scalar_select %p232, %s21, 1
        %p234 = scmp.lt.s32.totalorder %s22, 0
        %s235 = scalar_select %p234, %s22, 0
        %s236 = smul.addr %s233, 4
        %s237 = sadd.s32 %s235, %s236
        %s238 = smul.addr %s237, 8
        %s239 = scalar_lea.vmem %s0, %s238
      $region32: #{_memory_read.2} parent=27 // pred_fallthru
        _
    $region28: #{_memory_read.2} parent=5 // pred_fallthru
      _
    %p240 = scmp.le.s32.totalorder 1, %s14
    %p241 = scmp.lt.s32.totalorder %s14, 3
    %p242 = pnand %p240, %p241
    %p243 = pneg %p242
    // Predicated region
    $region33: #{_memory_read.2} parent=5 // pred_check
      _
    $region34: #{_memory_read.2} parent=5 // pred_check_branch
      %245 = sbr.rel (%p242) target = $region36
    $region35: #{_memory_read.2} parent=5 // pred_region
      %s246 = ssub.s32 %s14, 1
      %p247 = scmp.lt.s32.totalorder %s23, 1
      %s248 = scalar_select %p247, %s23, 1
      %p249 = scmp.lt.s32.totalorder %s24, 0
      %s250 = scalar_select %p249, %s24, 0
      %s251 = smul.addr %s248, 4
      %s252 = sadd.s32 %s250, %s251
      %s253 = smul.addr %s252, 8
      %s254 = scalar_lea.vmem %s0, %s253
      %p255 = pneg %p54
      %p256 = pneg %p51
      %p257 = pneg %p75
      %p258 = pneg %p72
      %p259 = pneg %p96
      %p260 = pneg %p93
      %p261 = pneg %p117
      %p262 = pneg %p114
      %p263 = pneg %p145
      %p264 = pneg %p142
      %p265 = scmp.lt.s32.totalorder %s23, 1
      %s266 = scalar_select %p265, %s23, 1
      %p267 = scmp.lt.s32.totalorder %s24, 0
      %s268 = scalar_select %p267, %s24, 0
      %s269 = smul.addr %s268, 3
      %s270 = smul.addr %s266, 3
      %s271 = sadd.s32 %s269, %s270
      %s272 = smul.addr %s271, 8
      %s273 = scalar_lea.vmem %s4, %s272
      %p274 = pneg %p173
      %p275 = pneg %p170
      %p276 = scmp.lt.s32.totalorder %s23, 1
      %s277 = scalar_select %p276, %s23, 1
      %p278 = scmp.lt.s32.totalorder %s24, 0
      %s279 = scalar_select %p278, %s24, 0
      %s280 = smul.addr %s279, 4
      %s281 = smul.addr %s277, 4
      %s282 = sadd.s32 %s280, %s281
      %s283 = smul.addr %s282, 8
      %s284 = scalar_lea.vmem %s5, %s283
      %p285 = pneg %p201
      %p286 = pneg %p198
      %p287 = scmp.lt.s32.totalorder %s23, 1
      %s288 = scalar_select %p287, %s23, 1
      %p289 = scmp.lt.s32.totalorder %s24, 0
      %s290 = scalar_select %p289, %s24, 0
      %s291 = smul.addr %s290, 4
      %s292 = smul.addr %s288, 4
      %s293 = sadd.s32 %s291, %s292
      %s294 = smul.addr %s293, 8
      %s295 = scalar_lea.vmem %s6, %s294
      %p296 = scmp.lt.s32.totalorder %s23, 1
      %s297 = scalar_select %p296, %s23, 1
      %p298 = scmp.lt.s32.totalorder %s24, 0
      %s299 = scalar_select %p298, %s24, 0
      %s300 = smul.addr %s297, 4
      %s301 = sadd.s32 %s299, %s300
      %s302 = smul.addr %s301, 8
      %s303 = scalar_lea.vmem %s0, %s302
      %p304 = scmp.lt.s32.totalorder %s23, 1
      %s305 = scalar_select %p304, %s23, 1
      %p306 = scmp.lt.s32.totalorder %s24, 0
      %s307 = scalar_select %p306, %s24, 0
      %s308 = smul.addr %s307, 3
      %s309 = smul.addr %s305, 3
      %s310 = sadd.s32 %s308, %s309
      %s311 = smul.addr %s310, 8
      %s312 = scalar_lea.vmem %s4, %s311
      %p313 = scmp.lt.s32.totalorder %s23, 1
      %s314 = scalar_select %p313, %s23, 1
      %p315 = scmp.lt.s32.totalorder %s24, 0
      %s316 = scalar_select %p315, %s24, 0
      %s317 = smul.addr %s316, 4
      %s318 = smul.addr %s314, 4
      %s319 = sadd.s32 %s317, %s318
      %s320 = smul.addr %s319, 8
      %s321 = scalar_lea.vmem %s5, %s320
      %p322 = scmp.lt.s32.totalorder %s23, 1
      %s323 = scalar_select %p322, %s23, 1
      %p324 = scmp.lt.s32.totalorder %s24, 0
      %s325 = scalar_select %p324, %s24, 0
      %s326 = smul.addr %s325, 4
      %s327 = smul.addr %s323, 4
      %s328 = sadd.s32 %s326, %s327
      %s329 = smul.addr %s328, 8
      %s330 = scalar_lea.vmem %s6, %s329
      %v331 = vld [vmem:[%s303] sm:$0xff]
      %v332 = vld [vmem:[%s303 + $0x8] sm:$0xff]
      %v333 = vld [vmem:[%s303 + $0x10] sm:$0xff]
      %v334 = vld [vmem:[%s303 + $0x18] sm:$0xff]
      %v335 = vld [vmem:[%s1] sm:$0xff]
      %v336 = vld [vmem:[%s1 + $0x8] sm:$0xff]
      %v337 = vld [vmem:[%s1 + $0x10] sm:$0xff]
      %v338 = vld [vmem:[%s1 + $0x18] sm:$0xff]
      %v339 = vld [vmem:[%s1 + $0x20] sm:$0xff]
      %v340 = vld [vmem:[%s1 + $0x28] sm:$0xff]
      %v341 = vld [vmem:[%s1 + $0x30] sm:$0x7]
      %v342 = vld [vmem:[%s2] sm:$0xff]
      %v343 = vld [vmem:[%s2 + $0x8] sm:$0xff]
      %v344 = vld [vmem:[%s2 + $0x10] sm:$0xff]
      %v345 = vld [vmem:[%s2 + $0x18] sm:$0xff]
      %s346 = sld [smem:[#allocation2]]
      %v347 = vmul.f32 %v331, %v331
      %v348 = vmul.f32 %v332, %v332
      %v349 = vmul.f32 %v333, %v333
      %v350 = vmul.f32 %v334, %v334
      %vm351 = vcmask 523264
      %v352 = vsel %vm351, %v347, 0.0
      %v353 = vsel %vm351, %v348, 0.0
      %v354 = vadd.f32 %v352, %v353
      %v355 = vsel %vm351, %v349, 0.0
      %v356 = vadd.f32 %v354, %v355
      %v357 = vsel %vm351, %v350, 0.0
      %v358 = vadd.f32 %v356, %v357
      %v359 = vrot.slane %v358, 4
      %v360 = vadd.f32 %v358, %v359
      %v361 = vrot.slane %v360, 2
      %v362 = vadd.f32 %v360, %v361
      %v363 = vrot.slane %v362, 1
      %v364 = vadd.f32 %v362, %v363
      %v365 = vmax.f32 %v364, 1e-24
      %v366 = vrsqrt.pop %v365
      %v367 = vmul.f32 %v331, %v366
      %v368 = vmul.f32 %v332, %v366
      %v369 = vmul.f32 %v333, %v366
      %v370 = vmul.f32 %v334, %v366
      %vm371 = vcmask 261120
      %v373 = vsel %vm371, %v335, 0
      %v376 = vsel %vm371, %v336, 0
      %v379 = vsel %vm371, %v337, 0
      %v382 = vsel %vm371, %v338, 0
      %v385 = vsel %vm371, %v339, 0
      %v388 = vsel %vm371, %v340, 0
      %v391 = vsel %vm371, %v341, 0
      %393 = vmatprep.subr.mxu0 0.0
      %394 = vmatpush1.msra.mxu0 %v367
      %395 = vmatprep.subr.mxu0 0.0
      %396 = vmatpush1.msra.mxu0 %v368
      %397 = vmatprep.subr.mxu0 0.0
      %398 = vmatpush1.msra.mxu0 %v369
      %399 = vmatprep.subr.mxu0 0.0
      %400 = vmatpush1.msra.mxu0 %v370
      %401 = vmatprep.subr.mxu0 0.0
      %402 = vmatpush1.msra.mxu0 0.0
      %403 = vmatprep.subr.mxu0 0.0
      %404 = vmatpush1.msra.mxu0 0.0
      %405 = vmatprep.subr.mxu0 0.0
      %406 = vmatpush1.msra.mxu0 0.0
      %407 = vmatprep.subr.mxu0 0.0
      %408 = vmatpush1.msra.mxu0 0.0
      %409 = vmatprep.subr.mxu0 0.0
      %410 = vmatpush1.msra.mxu0 0.0
      %411 = vmatprep.subr.mxu0 0.0
      %412 = vmatpush1.msra.mxu0 0.0
      %413 = vmatprep.subr.mxu0 0.0
      %414 = vmatpush1.msra.mxu0 0.0
      %415 = vmatprep.subr.mxu0 0.0
      %416 = vmatpush1.msra.mxu0 0.0
      %417 = vmatprep.subr.mxu0 0.0
      %418 = vmatpush1.msra.mxu0 0.0
      %419 = vmatprep.subr.mxu0 0.0
      %420 = vmatpush1.msra.mxu0 0.0
      %421 = vmatprep.subr.mxu0 0.0
      %422 = vmatpush1.msra.mxu0 0.0
      %423 = vmatprep.subr.mxu0 0.0
      %424 = vmatpush1.msra.mxu0 0.0
      %425 = vmatprep.subr.mxu0 0.0
      %426 = vmatpush1.msra.mxu0 0.0
      %427 = vmatprep.subr.mxu0 0.0
      %428 = vmatpush1.msra.mxu0 0.0
      %429 = vmatprep.subr.mxu0 0.0
      %430 = vmatpush1.msra.mxu0 0.0
      %431 = vmatprep.subr.mxu0 0.0
      %432 = vmatpush1.msra.mxu0 0.0
      %433 = vmatprep.subr.mxu0 0.0
      %434 = vmatpush1.msra.mxu0 0.0
      %435 = vmatprep.subr.mxu0 0.0
      %436 = vmatpush1.msra.mxu0 0.0
      %437 = vmatprep.subr.mxu0 0.0
      %438 = vmatpush1.msra.mxu0 0.0
      %439 = vmatprep.subr.mxu0 0.0
      %440 = vmatpush1.msra.mxu0 0.0
      %441 = vmatprep.subr.mxu0 0.0
      %442 = vmatpush1.msra.mxu0 0.0
      %443 = vmatprep.subr.mxu0 0.0
      %444 = vmatpush1.msra.mxu0 0.0
      %445 = vmatprep.subr.mxu0 0.0
      %446 = vmatpush1.msra.mxu0 0.0
      %447 = vmatprep.subr.mxu0 0.0
      %448 = vmatpush1.msra.mxu0 0.0
      %449 = vmatprep.subr.mxu0 0.0
      %450 = vmatpush1.msra.mxu0 0.0
      %451 = vmatprep.subr.mxu0 0.0
      %452 = vmatpush1.msra.mxu0 0.0
      %453 = vmatprep.subr.mxu0 0.0
      %454 = vmatpush1.msra.mxu0 0.0
      %455 = vmatprep.subr.mxu0 0.0
      %456 = vmatpush1.msra.mxu0 0.0
      %457 = vmatprep.mubr.f32.mxu0 0.0
      %458 = vmatmul.mubr.f32.gmra.mrb[0].mxu0 %v373
      %v459 = vpop.f32.mrb[0].mxu0
      %v460 = vadd.f32 0.0, %v459
      %v461 = vpop.f32.mrb[0].mxu0
      %462 = vmatprep.mubr.f32.mxu0 0.0
      %463 = vmatmul.mubr.f32.gmra.mrb[0].mxu0 %v376
      %v464 = vpop.f32.mrb[0].mxu0
      %v465 = vadd.f32 0.0, %v464
      %v466 = vpop.f32.mrb[0].mxu0
      %467 = vmatprep.mubr.f32.mxu0 0.0
      %468 = vmatmul.mubr.f32.gmra.mrb[0].mxu0 %v379
      %v469 = vpop.f32.mrb[0].mxu0
      %v470 = vadd.f32 0.0, %v469
      %v471 = vpop.f32.mrb[0].mxu0
      %472 = vmatprep.mubr.f32.mxu0 0.0
      %473 = vmatmul.mubr.f32.gmra.mrb[0].mxu0 %v382
      %v474 = vpop.f32.mrb[0].mxu0
      %v475 = vadd.f32 0.0, %v474
      %v476 = vpop.f32.mrb[0].mxu0
      %477 = vmatprep.mubr.f32.mxu0 0.0
      %478 = vmatmul.mubr.f32.gmra.mrb[0].mxu0 %v385
      %v479 = vpop.f32.mrb[0].mxu0
      %v480 = vadd.f32 0.0, %v479
      %v481 = vpop.f32.mrb[0].mxu0
      %482 = vmatprep.mubr.f32.mxu0 0.0
      %483 = vmatmul.mubr.f32.gmra.mrb[0].mxu0 %v388
      %v484 = vpop.f32.mrb[0].mxu0
      %v485 = vadd.f32 0.0, %v484
      %v486 = vpop.f32.mrb[0].mxu0
      %487 = vmatprep.mubr.f32.mxu0 0.0
      %488 = vmatmul.mubr.f32.gmra.mrb[0].mxu0 %v391
      %v489 = vpop.f32.mrb[0].mxu0
      %v490 = vadd.f32 0.0, %v489
      %v491 = vpop.f32.mrb[0].mxu0
      %492 = vdwg.mxu0
      %v493 = vstv %s346
      %v494 = vsub.f32 %v480, %v493
      %v495 = vsub.f32 %v485, %v493
      %v496 = vsub.f32 %v490, %v493
      %v497 = vmul.f32 %v494, 1.442695
      %v498 = vpow.pop %v497
      %v499 = vmul.f32 %v495, 1.442695
      %v500 = vpow.pop %v499
      %v501 = vmul.f32 %v496, 1.442695
      %v502 = vpow.pop %v501
      %v503 = vsel %vm351, %v498, 0.0
      %v504 = vsel %vm351, %v500, 0.0
      %v505 = vadd.f32 %v503, %v504
      %vm506 = vcmask 518144
      %v507 = vsel %vm506, %v502, 0.0
      %v508 = vadd.f32 %v505, %v507
      %v509 = vrot.slane %v508, 4
      %v510 = vadd.f32 %v508, %v509
      %v511 = vrot.slane %v510, 2
      %v512 = vadd.f32 %v510, %v511
      %v513 = vrot.slane %v512, 1
      %v514 = vadd.f32 %v512, %v513
      %v515 = vrcp.pop %v514
      %v516 = vmul.f32 %v498, %v515
      %v517 = vmul.f32 %v500, %v515
      %v518 = vmul.f32 %v502, %v515
      %vm519 = vcmask 154624
      %v521 = vsel %vm519, %v342, 0
      %v524 = vsel %vm519, %v343, 0
      %v527 = vsel %vm519, %v344, 0
      %v530 = vsel %vm519, %v345, 0
      %vm532 = vcmask 1042432
      %v534 = vsel %vm532, %v518, 0
      %536 = vmatprep.subr.mxu0 0.0
      %537 = vmatpush1.msra.mxu0 %v516
      %538 = vmatprep.subr.mxu0 0.0
      %539 = vmatpush1.msra.mxu0 %v517
      %540 = vmatprep.subr.mxu0 0.0
      %541 = vmatpush1.msra.mxu0 %v534
      %542 = vmatprep.subr.mxu0 0.0
      %543 = vmatpush1.msra.mxu0 0.0
      %544 = vmatprep.subr.mxu0 0.0
      %545 = vmatpush1.msra.mxu0 0.0
      %546 = vmatprep.subr.mxu0 0.0
      %547 = vmatpush1.msra.mxu0 0.0
      %548 = vmatprep.subr.mxu0 0.0
      %549 = vmatpush1.msra.mxu0 0.0
      %550 = vmatprep.subr.mxu0 0.0
      %551 = vmatpush1.msra.mxu0 0.0
      %552 = vmatprep.subr.mxu0 0.0
      %553 = vmatpush1.msra.mxu0 0.0
      %554 = vmatprep.subr.mxu0 0.0
      %555 = vmatpush1.msra.mxu0 0.0
      %556 = vmatprep.subr.mxu0 0.0
      %557 = vmatpush1.msra.mxu0 0.0
      %558 = vmatprep.subr.mxu0 0.0
      %559 = vmatpush1.msra.mxu0 0.0
      %560 = vmatprep.subr.mxu0 0.0
      %561 = vmatpush1.msra.mxu0 0.0
      %562 = vmatprep.subr.mxu0 0.0
      %563 = vmatpush1.msra.mxu0 0.0
      %564 = vmatprep.subr.mxu0 0.0
      %565 = vmatpush1.msra.mxu0 0.0
      %566 = vmatprep.subr.mxu0 0.0
      %567 = vmatpush1.msra.mxu0 0.0
      %568 = vmatprep.subr.mxu0 0.0
      %569 = vmatpush1.msra.mxu0 0.0
      %570 = vmatprep.subr.mxu0 0.0
      %571 = vmatpush1.msra.mxu0 0.0
      %572 = vmatprep.subr.mxu0 0.0
      %573 = vmatpush1.msra.mxu0 0.0
      %574 = vmatprep.subr.mxu0 0.0
      %575 = vmatpush1.msra.mxu0 0.0
      %576 = vmatprep.subr.mxu0 0.0
      %577 = vmatpush1.msra.mxu0 0.0
      %578 = vmatprep.subr.mxu0 0.0
      %579 = vmatpush1.msra.mxu0 0.0
      %580 = vmatprep.subr.mxu0 0.0
      %581 = vmatpush1.msra.mxu0 0.0
      %582 = vmatprep.subr.mxu0 0.0
      %583 = vmatpush1.msra.mxu0 0.0
      %584 = vmatprep.subr.mxu0 0.0
      %585 = vmatpush1.msra.mxu0 0.0
      %586 = vmatprep.subr.mxu0 0.0
      %587 = vmatpush1.msra.mxu0 0.0
      %588 = vmatprep.subr.mxu0 0.0
      %589 = vmatpush1.msra.mxu0 0.0
      %590 = vmatprep.subr.mxu0 0.0
      %591 = vmatpush1.msra.mxu0 0.0
      %592 = vmatprep.subr.mxu0 0.0
      %593 = vmatpush1.msra.mxu0 0.0
      %594 = vmatprep.subr.mxu0 0.0
      %595 = vmatpush1.msra.mxu0 0.0
      %596 = vmatprep.subr.mxu0 0.0
      %597 = vmatpush1.msra.mxu0 0.0
      %598 = vmatprep.subr.mxu0 0.0
      %599 = vmatpush1.msra.mxu0 0.0
      %600 = vmatprep.mubr.f32.mxu0 0.0
      %601 = vmatmul.mubr.f32.gmra.mrb[0].mxu0 %v521
      %v602 = vpop.f32.mrb[0].mxu0
      %v603 = vadd.f32 0.0, %v602
      %v604 = vpop.f32.mrb[0].mxu0
      %605 = vmatprep.mubr.f32.mxu0 0.0
      %606 = vmatmul.mubr.f32.gmra.mrb[0].mxu0 %v524
      %v607 = vpop.f32.mrb[0].mxu0
      %v608 = vadd.f32 0.0, %v607
      %v609 = vpop.f32.mrb[0].mxu0
      %610 = vmatprep.mubr.f32.mxu0 0.0
      %611 = vmatmul.mubr.f32.gmra.mrb[0].mxu0 %v527
      %v612 = vpop.f32.mrb[0].mxu0
      %v613 = vadd.f32 0.0, %v612
      %v614 = vpop.f32.mrb[0].mxu0
      %615 = vmatprep.mubr.f32.mxu0 0.0
      %616 = vmatmul.mubr.f32.gmra.mrb[0].mxu0 %v530
      %v617 = vpop.f32.mrb[0].mxu0
      %v618 = vadd.f32 0.0, %v617
      %v619 = vpop.f32.mrb[0].mxu0
      %620 = vdwg.mxu0
      %v621 = vadd.f32 %v460, %v603
      %v622 = vadd.f32 %v465, %v608
      %v623 = vadd.f32 %v470, %v613
      %v624 = vadd.f32 %v475, %v618
      %625 = vadd.xlane.f32.xlu0 %v503
      %v626 = vpop.xlane.xlu0 %625
      %627 = vadd.xlane.f32.xlu0 %v504
      %v628 = vpop.xlane.xlu0 %627
      %629 = vadd.xlane.f32.xlu0 %v507
      %v630 = vpop.xlane.xlu0 %629
      %vm631 = vcmask 7168
      %632 = vst.msk [vmem:[%s312] sm:$0xff] %vm631, %v626
      %633 = vst.msk [vmem:[%s312 + $0x8] sm:$0xff] %vm631, %v628
      %vm634 = vcmask 2048
      %635 = vst.msk [vmem:[%s312 + $0x10] sm:$0x7] %vm634, %v630
      %v636 = vsel %vm351, %v621, 0.0
      %637 = vadd.xlane.f32.xlu0 %v636
      %v638 = vpop.xlane.xlu0 %637
      %v639 = vsel %vm351, %v622, 0.0
      %640 = vadd.xlane.f32.xlu0 %v639
      %v641 = vpop.xlane.xlu0 %640
      %v642 = vsel %vm351, %v623, 0.0
      %643 = vadd.xlane.f32.xlu0 %v642
      %v644 = vpop.xlane.xlu0 %643
      %v645 = vsel %vm351, %v624, 0.0
      %646 = vadd.xlane.f32.xlu0 %v645
      %v647 = vpop.xlane.xlu0 %646
      %648 = vst.msk [vmem:[%s321] sm:$0xff] %vm631, %v638
      %649 = vst.msk [vmem:[%s321 + $0x8] sm:$0xff] %vm631, %v641
      %650 = vst.msk [vmem:[%s321 + $0x10] sm:$0xff] %vm631, %v644
      %651 = vst.msk [vmem:[%s321 + $0x18] sm:$0xff] %vm631, %v647
      %v652 = vmul.f32 %v621, %v621
      %v653 = vmul.f32 %v622, %v622
      %v654 = vmul.f32 %v623, %v623
      %v655 = vmul.f32 %v624, %v624
      %v656 = vsel %vm351, %v652, 0.0
      %657 = vadd.xlane.f32.xlu0 %v656
      %v658 = vpop.xlane.xlu0 %657
      %v659 = vsel %vm351, %v653, 0.0
      %660 = vadd.xlane.f32.xlu0 %v659
      %v661 = vpop.xlane.xlu0 %660
      %v662 = vsel %vm351, %v654, 0.0
      %663 = vadd.xlane.f32.xlu0 %v662
      %v664 = vpop.xlane.xlu0 %663
      %v665 = vsel %vm351, %v655, 0.0
      %666 = vadd.xlane.f32.xlu0 %v665
      %v667 = vpop.xlane.xlu0 %666
      %668 = vst.msk [vmem:[%s330] sm:$0xff] %vm631, %v658
      %669 = vst.msk [vmem:[%s330 + $0x8] sm:$0xff] %vm631, %v661
      %670 = vst.msk [vmem:[%s330 + $0x10] sm:$0xff] %vm631, %v664
      %671 = vst.msk [vmem:[%s330 + $0x18] sm:$0xff] %vm631, %v667
      %p672 = scmp.lt.s32.totalorder %s23, 1
      %s673 = scalar_select %p672, %s23, 1
      %p674 = scmp.lt.s32.totalorder %s24, 0
      %s675 = scalar_select %p674, %s24, 0
      %s676 = smul.addr %s675, 3
      %s677 = smul.addr %s673, 3
      %s678 = sadd.s32 %s676, %s677
      %s679 = smul.addr %s678, 8
      %s680 = scalar_lea.vmem %s4, %s679
      %p681 = scmp.lt.s32.totalorder %s23, 1
      %s682 = scalar_select %p681, %s23, 1
      %p683 = scmp.lt.s32.totalorder %s24, 0
      %s684 = scalar_select %p683, %s24, 0
      %s685 = smul.addr %s684, 4
      %s686 = smul.addr %s682, 4
      %s687 = sadd.s32 %s685, %s686
      %s688 = smul.addr %s687, 8
      %s689 = scalar_lea.vmem %s5, %s688
      %p690 = scmp.lt.s32.totalorder %s23, 1
      %s691 = scalar_select %p690, %s23, 1
      %p692 = scmp.lt.s32.totalorder %s24, 0
      %s693 = scalar_select %p692, %s24, 0
      %s694 = smul.addr %s693, 4
      %s695 = smul.addr %s691, 4
      %s696 = sadd.s32 %s694, %s695
      %s697 = smul.addr %s696, 8
      %s698 = scalar_lea.vmem %s6, %s697
      // Predicated region
      $region37: #{_memory_read.2} parent=35 // pred_check
        %p699 = pneg %p142
      $region38: #{_memory_read.2} parent=35 // pred_check_branch
        %701 = sbr.rel (%p699) target = $region40
      $region39: #{_memory_read.2} parent=35 // pred_region
        _
      $region40: #{_memory_read.2} parent=35 // pred_fallthru
        _
      // Predicated region
      $region41: #{_memory_read.2} parent=35 // pred_check
        %p702 = pneg %p170
      $region42: #{_memory_read.2} parent=35 // pred_check_branch
        %704 = sbr.rel (%p702) target = $region44
      $region43: #{_memory_read.2} parent=35 // pred_region
        _
      $region44: #{_memory_read.2} parent=35 // pred_fallthru
        _
      // Predicated region
      $region45: #{_memory_read.2} parent=35 // pred_check
        %p705 = pneg %p198
      $region46: #{_memory_read.2} parent=35 // pred_check_branch
        %707 = sbr.rel (%p705) target = $region48
      $region47: #{_memory_read.2} parent=35 // pred_region
        _
      $region48: #{_memory_read.2} parent=35 // pred_fallthru
        _
    $region36: #{_memory_read.2} parent=5 // pred_fallthru
      _
    %p708 = scmp.le.s32.totalorder 2, %s14
    // Predicated region
    $region49: #{_memory_read.2} parent=5 // pred_check
      %p709 = pneg %p708
    $region50: #{_memory_read.2} parent=5 // pred_check_branch
      %711 = sbr.rel (%p709) target = $region52
    $region51: #{_memory_read.2} parent=5 // pred_region
      %s712 = ssub.s32 %s14, 2
      // Predicated region
      $region53: #{_memory_read.2} parent=51 // pred_check
        %p713 = pneg %p148
      $region54: #{_memory_read.2} parent=51 // pred_check_branch
        %715 = sbr.rel (%p713) target = $region56
      $region55: #{_memory_read.2} parent=51 // pred_region
        %p716 = scmp.lt.s32.totalorder %s25, 1
        %s717 = scalar_select %p716, %s25, 1
        %p718 = scmp.lt.s32.totalorder %s26, 0
        %s719 = scalar_select %p718, %s26, 0
        %s720 = smul.addr %s719, 3
        %s721 = smul.addr %s717, 3
        %s722 = sadd.s32 %s720, %s721
        %s723 = smul.addr %s722, 8
        %s724 = scalar_lea.vmem %s4, %s723
      $region56: #{_memory_read.2} parent=51 // pred_fallthru
        _
      // Predicated region
      $region57: #{_memory_read.2} parent=51 // pred_check
        %p725 = pneg %p176
      $region58: #{_memory_read.2} parent=51 // pred_check_branch
        %727 = sbr.rel (%p725) target = $region60
      $region59: #{_memory_read.2} parent=51 // pred_region
        %p728 = scmp.lt.s32.totalorder %s25, 1
        %s729 = scalar_select %p728, %s25, 1
        %p730 = scmp.lt.s32.totalorder %s26, 0
        %s731 = scalar_select %p730, %s26, 0
        %s732 = smul.addr %s731, 4
        %s733 = smul.addr %s729, 4
        %s734 = sadd.s32 %s732, %s733
        %s735 = smul.addr %s734, 8
        %s736 = scalar_lea.vmem %s5, %s735
      $region60: #{_memory_read.2} parent=51 // pred_fallthru
        _
      // Predicated region
      $region61: #{_memory_read.2} parent=51 // pred_check
        %p737 = pneg %p204
      $region62: #{_memory_read.2} parent=51 // pred_check_branch
        %739 = sbr.rel (%p737) target = $region64
      $region63: #{_memory_read.2} parent=51 // pred_region
        %p740 = scmp.lt.s32.totalorder %s25, 1
        %s741 = scalar_select %p740, %s25, 1
        %p742 = scmp.lt.s32.totalorder %s26, 0
        %s743 = scalar_select %p742, %s26, 0
        %s744 = smul.addr %s743, 4
        %s745 = smul.addr %s741, 4
        %s746 = sadd.s32 %s744, %s745
        %s747 = smul.addr %s746, 8
        %s748 = scalar_lea.vmem %s6, %s747
      $region64: #{_memory_read.2} parent=51 // pred_fallthru
        _
    $region52: #{_memory_read.2} parent=5 // pred_fallthru
      _
  $region6: #{_memory_read.2} parent=0 // loop_footer
    %s18 = sadd.s32 1, %s14
  $region7: #{_memory_read.2} parent=0 // loop_footer_branch
    %13 = sbr.rel target = $region3
  $region8: #{_memory_read.2} parent=0 // loop_exit
    _

// kernel: _memory_read.3
$region0: #{_memory_read.3}
  #allocation0 [shape = 'u32[]', space=smem, size = 0x4, offset = 0x4, fixed_abs, tag = 'smem constant byte address 0x4 - core index']
  #allocation1 [shape = 'u32[144,128]{1,0:T(1,128)}', space=vmem, size = 0x12000, scoped, tag = 'internal scratch']
  #allocation2 [shape = 'f32[1]{0:T(128)S(6)}', space=smem, size = 0x200, scoped, tag = 'scoped memory for _memory_read.3']
  %s0 = inlined_call_operand.vmem [shape: f32[2,32,64], index: 0, kind: input, shape index: {}]
  %s1 = inlined_call_operand.vmem [shape: f32[51,32], index: 1, kind: input, shape index: {}]
  %s2 = inlined_call_operand.vmem [shape: f32[32,19], index: 2, kind: input, shape index: {}]
  %s3 = inlined_call_operand.<no memory space> [shape: f32[1], index: 3, kind: input, shape index: {}]
  %s4 = inlined_call_operand.vmem [shape: f32[32,1], index: 4, kind: input, shape index: {}]
  %s5 = inlined_call_operand.vmem [shape: f32[32,1], index: 5, kind: input, shape index: {}]
  %s6 = inlined_call_operand.vmem [shape: f32[19,1], index: 6, kind: input, shape index: {}]
  %s7 = inlined_call_operand.vmem [shape: f32[2,32,64], index: 7, kind: output, shape index: {0}]
  %s8 = inlined_call_operand.vmem [shape: f32[2,19,64], index: 8, kind: output, shape index: {1}]
  %s9 = inlined_call_operand.vmem [shape: f32[2,19,64], index: 9, kind: output, shape index: {2}]
  %10 = xla_tuple %s7, %s8, %s9
  %s11 = sld [smem:[#allocation0]]
  $region77: #{_memory_read.3} parent=0
    _
  %s13 = ssub.s32 1, %s11
  %s14 = scalar_select 0, %s13, %s11
  %15 = sst [smem:[#allocation2]] %s3
  loop: start=0, step=1, limit=4
  $region2: #{_memory_read.3} parent=0 // loop_pre_header
    _
  $region3: #{_memory_read.3} parent=0 // loop_header
    %s17 = sphi 0, %s21
    %p18 = scmp.ge.s32.totalorder %s17, 4
    %s24 = sphi 0, %s36
    %s25 = sphi 0, %s32
    %s26 = sphi 0, %s24
    %s27 = sphi 0, %s25
    %s28 = sphi 0, %s26
    %s29 = sphi 0, %s27
    %s41 = sphi 0, %s43
    %s44 = sphi 0, %s41
    %s45 = sphi 0, %s44
    %s61 = sphi 0, %s45
    %s65 = sphi 0, %s65
    %s67 = sphi 0, %s65
    %s68 = sphi 0, %s67
    %s82 = sphi 0, %s68
    %s86 = sphi 0, %s86
    %s88 = sphi 0, %s86
    %s89 = sphi 0, %s88
    %s103 = sphi 0, %s89
    %s107 = sphi 0, %s107
    %s109 = sphi 0, %s107
    %s110 = sphi 0, %s109
    %s124 = sphi 0, %s110
    %s128 = sphi 0, %s128
    %s130 = sphi 0, %s128
    %s131 = sphi 0, %s130
    %s145 = sphi 0, %s131
    %s149 = sphi 0, %s149
    %s151 = sphi 0, %s149
    %s152 = sphi 0, %s151
    %s166 = sphi 0, %s152
    %s170 = sphi 0, %s170
    %s172 = sphi 0, %s170
    %s173 = sphi 0, %s172
    %s187 = sphi 0, %s173
    %s195 = sphi 0, %s197
    %s198 = sphi 0, %s195
    %s199 = sphi 0, %s198
    %s215 = sphi 0, %s199
    %s223 = sphi 0, %s225
    %s226 = sphi 0, %s223
    %s227 = sphi 0, %s226
    %s243 = sphi 0, %s227
    %s251 = sphi 0, %s253
    %s254 = sphi 0, %s251
    %s255 = sphi 0, %s254
    %s271 = sphi 0, %s255
  $region4: #{_memory_read.3} parent=0 // loop_header_branch
    %20 = sbr.rel (%p18) target = $region8
  $region5: #{_memory_read.3} parent=0 // loop_body
    %s22 = ssub.s32 %s17, 1
    %s23 = ssub.s32 %s17, 2
    %s30 = sadd.s32 1, %s25
    %p31 = scmp.ge.s32.totalorder %s30, 1
    %s32 = scalar_select %p31, 0, %s30
    %s33 = sadd.s32 1, %s24
    %s34 = scalar_select %p31, %s33, %s24
    %p35 = scmp.ge.s32.totalorder %s34, 2
    %s36 = scalar_select %p35, 0, %s34
    %s37 = ssub.s32 %s24, %s36
    %s38 = ssub.s32 %s25, %s32
    %s39 = sor.u32 %s37, %s38
    %p40 = scmp.eq.s32.totalorder %s39, 0
    %s42 = sadd.s32 %s41, 1
    %s43 = scalar_select %p40, %s41, %s42
    %p46 = pneg %p40
    %p47 = scmp.eq.s32.totalorder %s17, 1
    %p48 = por %p46, %p47
    %p49 = scmp.ne.s32.totalorder %s41, %s44
    %p50 = scmp.eq.s32.totalorder %s17, 0
    %p51 = por %p49, %p50
    %p52 = scmp.ne.s32.totalorder %s41, %s44
    %p53 = scmp.eq.s32.totalorder %s22, 1
    %p54 = por %p52, %p53
    %p55 = scmp.ne.s32.totalorder %s44, %s45
    %p56 = scmp.eq.s32.totalorder %s22, 0
    %p57 = por %p55, %p56
    %p58 = scmp.ne.s32.totalorder %s44, %s45
    %p59 = scmp.eq.s32.totalorder %s23, 1
    %p60 = por %p58, %p59
    %p62 = scmp.ne.s32.totalorder %s45, %s61
    %p63 = scmp.eq.s32.totalorder %s23, 0
    %p64 = por %p62, %p63
    %s66 = sadd.s32 %s65, 1
    %p69 = scmp.eq.s32.totalorder %s17, 1
    %p70 = scmp.ne.s32.totalorder %s65, %s67
    %p71 = scmp.eq.s32.totalorder %s17, 0
    %p72 = por %p70, %p71
    %p73 = scmp.ne.s32.totalorder %s65, %s67
    %p74 = scmp.eq.s32.totalorder %s22, 1
    %p75 = por %p73, %p74
    %p76 = scmp.ne.s32.totalorder %s67, %s68
    %p77 = scmp.eq.s32.totalorder %s22, 0
    %p78 = por %p76, %p77
    %p79 = scmp.ne.s32.totalorder %s67, %s68
    %p80 = scmp.eq.s32.totalorder %s23, 1
    %p81 = por %p79, %p80
    %p83 = scmp.ne.s32.totalorder %s68, %s82
    %p84 = scmp.eq.s32.totalorder %s23, 0
    %p85 = por %p83, %p84
    %s87 = sadd.s32 %s86, 1
    %p90 = scmp.eq.s32.totalorder %s17, 1
    %p91 = scmp.ne.s32.totalorder %s86, %s88
    %p92 = scmp.eq.s32.totalorder %s17, 0
    %p93 = por %p91, %p92
    %p94 = scmp.ne.s32.totalorder %s86, %s88
    %p95 = scmp.eq.s32.totalorder %s22, 1
    %p96 = por %p94, %p95
    %p97 = scmp.ne.s32.totalorder %s88, %s89
    %p98 = scmp.eq.s32.totalorder %s22, 0
    %p99 = por %p97, %p98
    %p100 = scmp.ne.s32.totalorder %s88, %s89
    %p101 = scmp.eq.s32.totalorder %s23, 1
    %p102 = por %p100, %p101
    %p104 = scmp.ne.s32.totalorder %s89, %s103
    %p105 = scmp.eq.s32.totalorder %s23, 0
    %p106 = por %p104, %p105
    %s108 = sadd.s32 %s107, 1
    %p111 = scmp.eq.s32.totalorder %s17, 1
    %p112 = scmp.ne.s32.totalorder %s107, %s109
    %p113 = scmp.eq.s32.totalorder %s17, 0
    %p114 = por %p112, %p113
    %p115 = scmp.ne.s32.totalorder %s107, %s109
    %p116 = scmp.eq.s32.totalorder %s22, 1
    %p117 = por %p115, %p116
    %p118 = scmp.ne.s32.totalorder %s109, %s110
    %p119 = scmp.eq.s32.totalorder %s22, 0
    %p120 = por %p118, %p119
    %p121 = scmp.ne.s32.totalorder %s109, %s110
    %p122 = scmp.eq.s32.totalorder %s23, 1
    %p123 = por %p121, %p122
    %p125 = scmp.ne.s32.totalorder %s110, %s124
    %p126 = scmp.eq.s32.totalorder %s23, 0
    %p127 = por %p125, %p126
    %s129 = sadd.s32 %s128, 1
    %p132 = scmp.eq.s32.totalorder %s17, 1
    %p133 = scmp.ne.s32.totalorder %s128, %s130
    %p134 = scmp.eq.s32.totalorder %s17, 0
    %p135 = por %p133, %p134
    %p136 = scmp.ne.s32.totalorder %s128, %s130
    %p137 = scmp.eq.s32.totalorder %s22, 1
    %p138 = por %p136, %p137
    %p139 = scmp.ne.s32.totalorder %s130, %s131
    %p140 = scmp.eq.s32.totalorder %s22, 0
    %p141 = por %p139, %p140
    %p142 = scmp.ne.s32.totalorder %s130, %s131
    %p143 = scmp.eq.s32.totalorder %s23, 1
    %p144 = por %p142, %p143
    %p146 = scmp.ne.s32.totalorder %s131, %s145
    %p147 = scmp.eq.s32.totalorder %s23, 0
    %p148 = por %p146, %p147
    %s150 = sadd.s32 %s149, 1
    %p153 = scmp.eq.s32.totalorder %s17, 1
    %p154 = scmp.ne.s32.totalorder %s149, %s151
    %p155 = scmp.eq.s32.totalorder %s17, 0
    %p156 = por %p154, %p155
    %p157 = scmp.ne.s32.totalorder %s149, %s151
    %p158 = scmp.eq.s32.totalorder %s22, 1
    %p159 = por %p157, %p158
    %p160 = scmp.ne.s32.totalorder %s151, %s152
    %p161 = scmp.eq.s32.totalorder %s22, 0
    %p162 = por %p160, %p161
    %p163 = scmp.ne.s32.totalorder %s151, %s152
    %p164 = scmp.eq.s32.totalorder %s23, 1
    %p165 = por %p163, %p164
    %p167 = scmp.ne.s32.totalorder %s152, %s166
    %p168 = scmp.eq.s32.totalorder %s23, 0
    %p169 = por %p167, %p168
    %s171 = sadd.s32 %s170, 1
    %p174 = scmp.eq.s32.totalorder %s17, 1
    %p175 = scmp.ne.s32.totalorder %s170, %s172
    %p176 = scmp.eq.s32.totalorder %s17, 0
    %p177 = por %p175, %p176
    %p178 = scmp.ne.s32.totalorder %s170, %s172
    %p179 = scmp.eq.s32.totalorder %s22, 1
    %p180 = por %p178, %p179
    %p181 = scmp.ne.s32.totalorder %s172, %s173
    %p182 = scmp.eq.s32.totalorder %s22, 0
    %p183 = por %p181, %p182
    %p184 = scmp.ne.s32.totalorder %s172, %s173
    %p185 = scmp.eq.s32.totalorder %s23, 1
    %p186 = por %p184, %p185
    %p188 = scmp.ne.s32.totalorder %s173, %s187
    %p189 = scmp.eq.s32.totalorder %s23, 0
    %p190 = por %p188, %p189
    %s191 = ssub.s32 %s24, %s36
    %s192 = ssub.s32 %s25, %s32
    %s193 = sor.u32 %s191, %s192
    %p194 = scmp.eq.s32.totalorder %s193, 0
    %s196 = sadd.s32 %s195, 1
    %s197 = scalar_select %p194, %s195, %s196
    %p200 = pneg %p194
    %p201 = scmp.eq.s32.totalorder %s17, 1
    %p202 = por %p200, %p201
    %p203 = scmp.ne.s32.totalorder %s195, %s198
    %p204 = scmp.eq.s32.totalorder %s17, 0
    %p205 = por %p203, %p204
    %p206 = scmp.ne.s32.totalorder %s195, %s198
    %p207 = scmp.eq.s32.totalorder %s22, 1
    %p208 = por %p206, %p207
    %p209 = scmp.ne.s32.totalorder %s198, %s199
    %p210 = scmp.eq.s32.totalorder %s22, 0
    %p211 = por %p209, %p210
    %p212 = scmp.ne.s32.totalorder %s198, %s199
    %p213 = scmp.eq.s32.totalorder %s23, 1
    %p214 = por %p212, %p213
    %p216 = scmp.ne.s32.totalorder %s199, %s215
    %p217 = scmp.eq.s32.totalorder %s23, 0
    %p218 = por %p216, %p217
    %s219 = ssub.s32 %s24, %s36
    %s220 = ssub.s32 %s25, %s32
    %s221 = sor.u32 %s219, %s220
    %p222 = scmp.eq.s32.totalorder %s221, 0
    %s224 = sadd.s32 %s223, 1
    %s225 = scalar_select %p222, %s223, %s224
    %p228 = pneg %p222
    %p229 = scmp.eq.s32.totalorder %s17, 1
    %p230 = por %p228, %p229
    %p231 = scmp.ne.s32.totalorder %s223, %s226
    %p232 = scmp.eq.s32.totalorder %s17, 0
    %p233 = por %p231, %p232
    %p234 = scmp.ne.s32.totalorder %s223, %s226
    %p235 = scmp.eq.s32.totalorder %s22, 1
    %p236 = por %p234, %p235
    %p237 = scmp.ne.s32.totalorder %s226, %s227
    %p238 = scmp.eq.s32.totalorder %s22, 0
    %p239 = por %p237, %p238
    %p240 = scmp.ne.s32.totalorder %s226, %s227
    %p241 = scmp.eq.s32.totalorder %s23, 1
    %p242 = por %p240, %p241
    %p244 = scmp.ne.s32.totalorder %s227, %s243
    %p245 = scmp.eq.s32.totalorder %s23, 0
    %p246 = por %p244, %p245
    %s247 = ssub.s32 %s24, %s36
    %s248 = ssub.s32 %s25, %s32
    %s249 = sor.u32 %s247, %s248
    %p250 = scmp.eq.s32.totalorder %s249, 0
    %s252 = sadd.s32 %s251, 1
    %s253 = scalar_select %p250, %s251, %s252
    %p256 = pneg %p250
    %p257 = scmp.eq.s32.totalorder %s17, 1
    %p258 = por %p256, %p257
    %p259 = scmp.ne.s32.totalorder %s251, %s254
    %p260 = scmp.eq.s32.totalorder %s17, 0
    %p261 = por %p259, %p260
    %p262 = scmp.ne.s32.totalorder %s251, %s254
    %p263 = scmp.eq.s32.totalorder %s22, 1
    %p264 = por %p262, %p263
    %p265 = scmp.ne.s32.totalorder %s254, %s255
    %p266 = scmp.eq.s32.totalorder %s22, 0
    %p267 = por %p265, %p266
    %p268 = scmp.ne.s32.totalorder %s254, %s255
    %p269 = scmp.eq.s32.totalorder %s23, 1
    %p270 = por %p268, %p269
    %p272 = scmp.ne.s32.totalorder %s255, %s271
    %p273 = scmp.eq.s32.totalorder %s23, 0
    %p274 = por %p272, %p273
    %p275 = scmp.le.s32.totalorder 1, %s17
    %p276 = scmp.lt.s32.totalorder %s17, 3
    %p277 = pnand %p275, %p276
    %p278 = pneg %p277
    // Predicated region
    $region9: #{_memory_read.3} parent=5 // pred_check
      _
    $region10: #{_memory_read.3} parent=5 // pred_check_branch
      %280 = sbr.rel (%p277) target = $region12
    $region11: #{_memory_read.3} parent=5 // pred_region
      %s281 = ssub.s32 %s17, 1
      // Predicated region
      $region13: #{_memory_read.3} parent=11 // pred_check
        %p282 = pneg %p78
      $region14: #{_memory_read.3} parent=11 // pred_check_branch
        %284 = sbr.rel (%p282) target = $region16
      $region15: #{_memory_read.3} parent=11 // pred_region
        _
      $region16: #{_memory_read.3} parent=11 // pred_fallthru
        _
      // Predicated region
      $region17: #{_memory_read.3} parent=11 // pred_check
        %p285 = pneg %p99
      $region18: #{_memory_read.3} parent=11 // pred_check_branch
        %287 = sbr.rel (%p285) target = $region20
      $region19: #{_memory_read.3} parent=11 // pred_region
        _
      $region20: #{_memory_read.3} parent=11 // pred_fallthru
        _
      // Predicated region
      $region21: #{_memory_read.3} parent=11 // pred_check
        %p288 = pneg %p120
      $region22: #{_memory_read.3} parent=11 // pred_check_branch
        %290 = sbr.rel (%p288) target = $region24
      $region23: #{_memory_read.3} parent=11 // pred_region
        _
      $region24: #{_memory_read.3} parent=11 // pred_fallthru
        _
      // Predicated region
      $region25: #{_memory_read.3} parent=11 // pred_check
        %p291 = pneg %p141
      $region26: #{_memory_read.3} parent=11 // pred_check_branch
        %293 = sbr.rel (%p291) target = $region28
      $region27: #{_memory_read.3} parent=11 // pred_region
        _
      $region28: #{_memory_read.3} parent=11 // pred_fallthru
        _
      // Predicated region
      $region29: #{_memory_read.3} parent=11 // pred_check
        %p294 = pneg %p162
      $region30: #{_memory_read.3} parent=11 // pred_check_branch
        %296 = sbr.rel (%p294) target = $region32
      $region31: #{_memory_read.3} parent=11 // pred_region
        _
      $region32: #{_memory_read.3} parent=11 // pred_fallthru
        _
      // Predicated region
      $region33: #{_memory_read.3} parent=11 // pred_check
        %p297 = pneg %p183
      $region34: #{_memory_read.3} parent=11 // pred_check_branch
        %299 = sbr.rel (%p297) target = $region36
      $region35: #{_memory_read.3} parent=11 // pred_region
        _
      $region36: #{_memory_read.3} parent=11 // pred_fallthru
        _
    $region12: #{_memory_read.3} parent=5 // pred_fallthru
      _
    %p300 = scmp.lt.s32.totalorder %s17, 2
    // Predicated region
    $region37: #{_memory_read.3} parent=5 // pred_check
      %p301 = pneg %p300
    $region38: #{_memory_read.3} parent=5 // pred_check_branch
      %303 = sbr.rel (%p301) target = $region40
    $region39: #{_memory_read.3} parent=5 // pred_region
      // Predicated region
      $region41: #{_memory_read.3} parent=39 // pred_check
        %p304 = pneg %p51
      $region42: #{_memory_read.3} parent=39 // pred_check_branch
        %306 = sbr.rel (%p304) target = $region44
      $region43: #{_memory_read.3} parent=39 // pred_region
        %p307 = scmp.lt.s32.totalorder %s24, 1
        %s308 = scalar_select %p307, %s24, 1
        %p309 = scmp.lt.s32.totalorder %s25, 0
        %s310 = scalar_select %p309, %s25, 0
        %s311 = smul.addr %s308, 4
        %s312 = sadd.s32 %s310, %s311
        %s313 = smul.addr %s312, 8
        %s314 = scalar_lea.vmem %s0, %s313
      $region44: #{_memory_read.3} parent=39 // pred_fallthru
        _
    $region40: #{_memory_read.3} parent=5 // pred_fallthru
      _
    %p315 = scmp.le.s32.totalorder 1, %s17
    %p316 = scmp.lt.s32.totalorder %s17, 3
    %p317 = pnand %p315, %p316
    %p318 = pneg %p317
    // Predicated region
    $region45: #{_memory_read.3} parent=5 // pred_check
      _
    $region46: #{_memory_read.3} parent=5 // pred_check_branch
      %320 = sbr.rel (%p317) target = $region48
    $region47: #{_memory_read.3} parent=5 // pred_region
      %s321 = ssub.s32 %s17, 1
      %p322 = scmp.lt.s32.totalorder %s26, 1
      %s323 = scalar_select %p322, %s26, 1
      %p324 = scmp.lt.s32.totalorder %s27, 0
      %s325 = scalar_select %p324, %s27, 0
      %s326 = smul.addr %s323, 4
      %s327 = sadd.s32 %s325, %s326
      %s328 = smul.addr %s327, 8
      %s329 = scalar_lea.vmem %s0, %s328
      %p330 = pneg %p57
      %p331 = pneg %p54
      %p332 = pneg %p78
      %p333 = pneg %p75
      %p334 = pneg %p99
      %p335 = pneg %p96
      %p336 = pneg %p120
      %p337 = pneg %p117
      %p338 = pneg %p141
      %p339 = pneg %p138
      %p340 = pneg %p162
      %p341 = pneg %p159
      %p342 = pneg %p183
      %p343 = pneg %p180
      %p344 = pneg %p211
      %p345 = pneg %p208
      %p346 = scmp.lt.s32.totalorder %s26, 1
      %s347 = scalar_select %p346, %s26, 1
      %p348 = scmp.lt.s32.totalorder %s27, 0
      %s349 = scalar_select %p348, %s27, 0
      %s350 = smul.addr %s347, 4
      %s351 = sadd.s32 %s349, %s350
      %s352 = smul.addr %s351, 8
      %s353 = scalar_lea.vmem %s7, %s352
      %p354 = pneg %p239
      %p355 = pneg %p236
      %p356 = scmp.lt.s32.totalorder %s26, 1
      %s357 = scalar_select %p356, %s26, 1
      %p358 = scmp.lt.s32.totalorder %s27, 0
      %s359 = scalar_select %p358, %s27, 0
      %s360 = smul.addr %s357, 3
      %s361 = sadd.s32 %s359, %s360
      %s362 = smul.addr %s361, 8
      %s363 = scalar_lea.vmem %s8, %s362
      %p364 = pneg %p267
      %p365 = pneg %p264
      %p366 = scmp.lt.s32.totalorder %s26, 1
      %s367 = scalar_select %p366, %s26, 1
      %p368 = scmp.lt.s32.totalorder %s27, 0
      %s369 = scalar_select %p368, %s27, 0
      %s370 = smul.addr %s367, 3
      %s371 = sadd.s32 %s369, %s370
      %s372 = smul.addr %s371, 8
      %s373 = scalar_lea.vmem %s9, %s372
      %p374 = scmp.lt.s32.totalorder %s26, 1
      %s375 = scalar_select %p374, %s26, 1
      %p376 = scmp.lt.s32.totalorder %s27, 0
      %s377 = scalar_select %p376, %s27, 0
      %s378 = smul.addr %s375, 4
      %s379 = sadd.s32 %s377, %s378
      %s380 = smul.addr %s379, 8
      %s381 = scalar_lea.vmem %s0, %s380
      %p382 = scmp.lt.s32.totalorder %s26, 1
      %s383 = scalar_select %p382, %s26, 1
      %p384 = scmp.lt.s32.totalorder %s27, 0
      %s385 = scalar_select %p384, %s27, 0
      %s386 = smul.addr %s383, 4
      %s387 = sadd.s32 %s385, %s386
      %s388 = smul.addr %s387, 8
      %s389 = scalar_lea.vmem %s7, %s388
      %p390 = scmp.lt.s32.totalorder %s26, 1
      %s391 = scalar_select %p390, %s26, 1
      %p392 = scmp.lt.s32.totalorder %s27, 0
      %s393 = scalar_select %p392, %s27, 0
      %s394 = smul.addr %s391, 3
      %s395 = sadd.s32 %s393, %s394
      %s396 = smul.addr %s395, 8
      %s397 = scalar_lea.vmem %s8, %s396
      %p398 = scmp.lt.s32.totalorder %s26, 1
      %s399 = scalar_select %p398, %s26, 1
      %p400 = scmp.lt.s32.totalorder %s27, 0
      %s401 = scalar_select %p400, %s27, 0
      %s402 = smul.addr %s399, 3
      %s403 = sadd.s32 %s401, %s402
      %s404 = smul.addr %s403, 8
      %s405 = scalar_lea.vmem %s9, %s404
      %v406 = vld [vmem:[%s381] sm:$0xff]
      %v407 = vld [vmem:[%s381 + $0x8] sm:$0xff]
      %v408 = vld [vmem:[%s381 + $0x10] sm:$0xff]
      %v409 = vld [vmem:[%s381 + $0x18] sm:$0xff]
      %v410 = vld [vmem:[%s1] sm:$0xff]
      %v411 = vld [vmem:[%s1 + $0x8] sm:$0xff]
      %v412 = vld [vmem:[%s1 + $0x10] sm:$0xff]
      %v413 = vld [vmem:[%s1 + $0x18] sm:$0xff]
      %v414 = vld [vmem:[%s1 + $0x20] sm:$0xff]
      %v415 = vld [vmem:[%s1 + $0x28] sm:$0xff]
      %v416 = vld [vmem:[%s1 + $0x30] sm:$0x7]
      %v417 = vld [vmem:[%s2] sm:$0xff]
      %v418 = vld [vmem:[%s2 + $0x8] sm:$0xff]
      %v419 = vld [vmem:[%s2 + $0x10] sm:$0xff]
      %v420 = vld [vmem:[%s2 + $0x18] sm:$0xff]
      %s421 = sld [smem:[#allocation2]]
      %v422 = vmul.f32 %v406, %v406
      %v423 = vmul.f32 %v407, %v407
      %v424 = vmul.f32 %v408, %v408
      %v425 = vmul.f32 %v409, %v409
      %vm426 = vcmask 523264
      %v427 = vsel %vm426, %v422, 0.0
      %v428 = vsel %vm426, %v423, 0.0
      %v429 = vadd.f32 %v427, %v428
      %v430 = vsel %vm426, %v424, 0.0
      %v431 = vadd.f32 %v429, %v430
      %v432 = vsel %vm426, %v425, 0.0
      %v433 = vadd.f32 %v431, %v432
      %v434 = vrot.slane %v433, 4
      %v435 = vadd.f32 %v433, %v434
      %v436 = vrot.slane %v435, 2
      %v437 = vadd.f32 %v435, %v436
      %v438 = vrot.slane %v437, 1
      %v439 = vadd.f32 %v437, %v438
      %v440 = vmax.f32 %v439, 1e-24
      %v441 = vrsqrt.pop %v440
      %v442 = vmul.f32 %v406, %v441
      %v443 = vmul.f32 %v407, %v441
      %v444 = vmul.f32 %v408, %v441
      %v445 = vmul.f32 %v409, %v441
      %vm446 = vcmask 261120
      %v448 = vsel %vm446, %v410, 0
      %v451 = vsel %vm446, %v411, 0
      %v454 = vsel %vm446, %v412, 0
      %v457 = vsel %vm446, %v413, 0
      %v460 = vsel %vm446, %v414, 0
      %v463 = vsel %vm446, %v415, 0
      %v466 = vsel %vm446, %v416, 0
      %468 = vmatprep.subr.mxu0 0.0
      %469 = vmatpush1.msra.mxu0 %v442
      %470 = vmatprep.subr.mxu0 0.0
      %471 = vmatpush1.msra.mxu0 %v443
      %472 = vmatprep.subr.mxu0 0.0
      %473 = vmatpush1.msra.mxu0 %v444
      %474 = vmatprep.subr.mxu0 0.0
      %475 = vmatpush1.msra.mxu0 %v445
      %476 = vmatprep.subr.mxu0 0.0
      %477 = vmatpush1.msra.mxu0 0.0
      %478 = vmatprep.subr.mxu0 0.0
      %479 = vmatpush1.msra.mxu0 0.0
      %480 = vmatprep.subr.mxu0 0.0
      %481 = vmatpush1.msra.mxu0 0.0
      %482 = vmatprep.subr.mxu0 0.0
      %483 = vmatpush1.msra.mxu0 0.0
      %484 = vmatprep.subr.mxu0 0.0
      %485 = vmatpush1.msra.mxu0 0.0
      %486 = vmatprep.subr.mxu0 0.0
      %487 = vmatpush1.msra.mxu0 0.0
      %488 = vmatprep.subr.mxu0 0.0
      %489 = vmatpush1.msra.mxu0 0.0
      %490 = vmatprep.subr.mxu0 0.0
      %491 = vmatpush1.msra.mxu0 0.0
      %492 = vmatprep.subr.mxu0 0.0
      %493 = vmatpush1.msra.mxu0 0.0
      %494 = vmatprep.subr.mxu0 0.0
      %495 = vmatpush1.msra.mxu0 0.0
      %496 = vmatprep.subr.mxu0 0.0
      %497 = vmatpush1.msra.mxu0 0.0
      %498 = vmatprep.subr.mxu0 0.0
      %499 = vmatpush1.msra.mxu0 0.0
      %500 = vmatprep.subr.mxu0 0.0
      %501 = vmatpush1.msra.mxu0 0.0
      %502 = vmatprep.subr.mxu0 0.0
      %503 = vmatpush1.msra.mxu0 0.0
      %504 = vmatprep.subr.mxu0 0.0
      %505 = vmatpush1.msra.mxu0 0.0
      %506 = vmatprep.subr.mxu0 0.0
      %507 = vmatpush1.msra.mxu0 0.0
      %508 = vmatprep.subr.mxu0 0.0
      %509 = vmatpush1.msra.mxu0 0.0
      %510 = vmatprep.subr.mxu0 0.0
      %511 = vmatpush1.msra.mxu0 0.0
      %512 = vmatprep.subr.mxu0 0.0
      %513 = vmatpush1.msra.mxu0 0.0
      %514 = vmatprep.subr.mxu0 0.0
      %515 = vmatpush1.msra.mxu0 0.0
      %516 = vmatprep.subr.mxu0 0.0
      %517 = vmatpush1.msra.mxu0 0.0
      %518 = vmatprep.subr.mxu0 0.0
      %519 = vmatpush1.msra.mxu0 0.0
      %520 = vmatprep.subr.mxu0 0.0
      %521 = vmatpush1.msra.mxu0 0.0
      %522 = vmatprep.subr.mxu0 0.0
      %523 = vmatpush1.msra.mxu0 0.0
      %524 = vmatprep.subr.mxu0 0.0
      %525 = vmatpush1.msra.mxu0 0.0
      %526 = vmatprep.subr.mxu0 0.0
      %527 = vmatpush1.msra.mxu0 0.0
      %528 = vmatprep.subr.mxu0 0.0
      %529 = vmatpush1.msra.mxu0 0.0
      %530 = vmatprep.subr.mxu0 0.0
      %531 = vmatpush1.msra.mxu0 0.0
      %532 = vmatprep.mubr.f32.mxu0 0.0
      %533 = vmatmul.mubr.f32.gmra.mrb[0].mxu0 %v448
      %v534 = vpop.f32.mrb[0].mxu0
      %v535 = vadd.f32 0.0, %v534
      %v536 = vpop.f32.mrb[0].mxu0
      %537 = vmatprep.mubr.f32.mxu0 0.0
      %538 = vmatmul.mubr.f32.gmra.mrb[0].mxu0 %v451
      %v539 = vpop.f32.mrb[0].mxu0
      %v540 = vadd.f32 0.0, %v539
      %v541 = vpop.f32.mrb[0].mxu0
      %542 = vmatprep.mubr.f32.mxu0 0.0
      %543 = vmatmul.mubr.f32.gmra.mrb[0].mxu0 %v454
      %v544 = vpop.f32.mrb[0].mxu0
      %v545 = vadd.f32 0.0, %v544
      %v546 = vpop.f32.mrb[0].mxu0
      %547 = vmatprep.mubr.f32.mxu0 0.0
      %548 = vmatmul.mubr.f32.gmra.mrb[0].mxu0 %v457
      %v549 = vpop.f32.mrb[0].mxu0
      %v550 = vadd.f32 0.0, %v549
      %v551 = vpop.f32.mrb[0].mxu0
      %552 = vmatprep.mubr.f32.mxu0 0.0
      %553 = vmatmul.mubr.f32.gmra.mrb[0].mxu0 %v460
      %v554 = vpop.f32.mrb[0].mxu0
      %v555 = vadd.f32 0.0, %v554
      %v556 = vpop.f32.mrb[0].mxu0
      %557 = vmatprep.mubr.f32.mxu0 0.0
      %558 = vmatmul.mubr.f32.gmra.mrb[0].mxu0 %v463
      %v559 = vpop.f32.mrb[0].mxu0
      %v560 = vadd.f32 0.0, %v559
      %v561 = vpop.f32.mrb[0].mxu0
      %562 = vmatprep.mubr.f32.mxu0 0.0
      %563 = vmatmul.mubr.f32.gmra.mrb[0].mxu0 %v466
      %v564 = vpop.f32.mrb[0].mxu0
      %v565 = vadd.f32 0.0, %v564
      %v566 = vpop.f32.mrb[0].mxu0
      %567 = vdwg.mxu0
      %v568 = vstv %s421
      %v569 = vsub.f32 %v555, %v568
      %v570 = vsub.f32 %v560, %v568
      %v571 = vsub.f32 %v565, %v568
      %v572 = vmul.f32 %v569, 1.442695
      %v573 = vpow.pop %v572
      %v574 = vmul.f32 %v570, 1.442695
      %v575 = vpow.pop %v574
      %v576 = vmul.f32 %v571, 1.442695
      %v577 = vpow.pop %v576
      %v578 = vsel %vm426, %v573, 0.0
      %v579 = vsel %vm426, %v575, 0.0
      %v580 = vadd.f32 %v578, %v579
      %vm581 = vcmask 518144
      %v582 = vsel %vm581, %v577, 0.0
      %v583 = vadd.f32 %v580, %v582
      %v584 = vrot.slane %v583, 4
      %v585 = vadd.f32 %v583, %v584
      %v586 = vrot.slane %v585, 2
      %v587 = vadd.f32 %v585, %v586
      %v588 = vrot.slane %v587, 1
      %v589 = vadd.f32 %v587, %v588
      %v590 = vrcp.pop %v589
      %v591 = vmul.f32 %v573, %v590
      %v592 = vmul.f32 %v575, %v590
      %v593 = vmul.f32 %v577, %v590
      %vm594 = vcmask 154624
      %v596 = vsel %vm594, %v417, 0
      %v599 = vsel %vm594, %v418, 0
      %v602 = vsel %vm594, %v419, 0
      %v605 = vsel %vm594, %v420, 0
      %vm607 = vcmask 1042432
      %v609 = vsel %vm607, %v593, 0
      %611 = vmatprep.subr.mxu0 0.0
      %612 = vmatpush1.msra.mxu0 %v591
      %613 = vmatprep.subr.mxu0 0.0
      %614 = vmatpush1.msra.mxu0 %v592
      %615 = vmatprep.subr.mxu0 0.0
      %616 = vmatpush1.msra.mxu0 %v609
      %617 = vmatprep.subr.mxu0 0.0
      %618 = vmatpush1.msra.mxu0 0.0
      %619 = vmatprep.subr.mxu0 0.0
      %620 = vmatpush1.msra.mxu0 0.0
      %621 = vmatprep.subr.mxu0 0.0
      %622 = vmatpush1.msra.mxu0 0.0
      %623 = vmatprep.subr.mxu0 0.0
      %624 = vmatpush1.msra.mxu0 0.0
      %625 = vmatprep.subr.mxu0 0.0
      %626 = vmatpush1.msra.mxu0 0.0
      %627 = vmatprep.subr.mxu0 0.0
      %628 = vmatpush1.msra.mxu0 0.0
      %629 = vmatprep.subr.mxu0 0.0
      %630 = vmatpush1.msra.mxu0 0.0
      %631 = vmatprep.subr.mxu0 0.0
      %632 = vmatpush1.msra.mxu0 0.0
      %633 = vmatprep.subr.mxu0 0.0
      %634 = vmatpush1.msra.mxu0 0.0
      %635 = vmatprep.subr.mxu0 0.0
      %636 = vmatpush1.msra.mxu0 0.0
      %637 = vmatprep.subr.mxu0 0.0
      %638 = vmatpush1.msra.mxu0 0.0
      %639 = vmatprep.subr.mxu0 0.0
      %640 = vmatpush1.msra.mxu0 0.0
      %641 = vmatprep.subr.mxu0 0.0
      %642 = vmatpush1.msra.mxu0 0.0
      %643 = vmatprep.subr.mxu0 0.0
      %644 = vmatpush1.msra.mxu0 0.0
      %645 = vmatprep.subr.mxu0 0.0
      %646 = vmatpush1.msra.mxu0 0.0
      %647 = vmatprep.subr.mxu0 0.0
      %648 = vmatpush1.msra.mxu0 0.0
      %649 = vmatprep.subr.mxu0 0.0
      %650 = vmatpush1.msra.mxu0 0.0
      %651 = vmatprep.subr.mxu0 0.0
      %652 = vmatpush1.msra.mxu0 0.0
      %653 = vmatprep.subr.mxu0 0.0
      %654 = vmatpush1.msra.mxu0 0.0
      %655 = vmatprep.subr.mxu0 0.0
      %656 = vmatpush1.msra.mxu0 0.0
      %657 = vmatprep.subr.mxu0 0.0
      %658 = vmatpush1.msra.mxu0 0.0
      %659 = vmatprep.subr.mxu0 0.0
      %660 = vmatpush1.msra.mxu0 0.0
      %661 = vmatprep.subr.mxu0 0.0
      %662 = vmatpush1.msra.mxu0 0.0
      %663 = vmatprep.subr.mxu0 0.0
      %664 = vmatpush1.msra.mxu0 0.0
      %665 = vmatprep.subr.mxu0 0.0
      %666 = vmatpush1.msra.mxu0 0.0
      %667 = vmatprep.subr.mxu0 0.0
      %668 = vmatpush1.msra.mxu0 0.0
      %669 = vmatprep.subr.mxu0 0.0
      %670 = vmatpush1.msra.mxu0 0.0
      %671 = vmatprep.subr.mxu0 0.0
      %672 = vmatpush1.msra.mxu0 0.0
      %673 = vmatprep.subr.mxu0 0.0
      %674 = vmatpush1.msra.mxu0 0.0
      %675 = vmatprep.mubr.f32.mxu0 0.0
      %676 = vmatmul.mubr.f32.gmra.mrb[0].mxu0 %v596
      %v677 = vpop.f32.mrb[0].mxu0
      %v678 = vadd.f32 0.0, %v677
      %v679 = vpop.f32.mrb[0].mxu0
      %680 = vmatprep.mubr.f32.mxu0 0.0
      %681 = vmatmul.mubr.f32.gmra.mrb[0].mxu0 %v599
      %v682 = vpop.f32.mrb[0].mxu0
      %v683 = vadd.f32 0.0, %v682
      %v684 = vpop.f32.mrb[0].mxu0
      %685 = vmatprep.mubr.f32.mxu0 0.0
      %686 = vmatmul.mubr.f32.gmra.mrb[0].mxu0 %v602
      %v687 = vpop.f32.mrb[0].mxu0
      %v688 = vadd.f32 0.0, %v687
      %v689 = vpop.f32.mrb[0].mxu0
      %690 = vmatprep.mubr.f32.mxu0 0.0
      %691 = vmatmul.mubr.f32.gmra.mrb[0].mxu0 %v605
      %v692 = vpop.f32.mrb[0].mxu0
      %v693 = vadd.f32 0.0, %v692
      %v694 = vpop.f32.mrb[0].mxu0
      %695 = vdwg.mxu0
      %v696 = vadd.f32 %v535, %v678
      %v697 = vadd.f32 %v540, %v683
      %v698 = vadd.f32 %v545, %v688
      %v699 = vadd.f32 %v550, %v693
      %v700 = vld [vmem:[%s4] sm:$0xff]
      %v701 = vld [vmem:[%s4 + $0x8] sm:$0xff]
      %v702 = vld [vmem:[%s4 + $0x10] sm:$0xff]
      %v703 = vld [vmem:[%s4 + $0x18] sm:$0xff]
      %705 = vset.pattern.permute.xlu0 0
      %706 = vperm.xlu0 %705, %v700
      %v707 = vpop.permute.xlu0 %706
      %710 = vset.pattern.permute.xlu0 0
      %711 = vperm.xlu0 %710, %v701
      %v712 = vpop.permute.xlu0 %711
      %715 = vset.pattern.permute.xlu0 0
      %716 = vperm.xlu0 %715, %v702
      %v717 = vpop.permute.xlu0 %716
      %720 = vset.pattern.permute.xlu0 0
      %721 = vperm.xlu0 %720, %v703
      %v722 = vpop.permute.xlu0 %721
      %v724 = vmul.f32 %v696, %v707
      %v725 = vmul.f32 %v697, %v712
      %v726 = vmul.f32 %v698, %v717
      %v727 = vmul.f32 %v699, %v722
      %v728 = vld [vmem:[%s5] sm:$0xff]
      %v729 = vld [vmem:[%s5 + $0x8] sm:$0xff]
      %v730 = vld [vmem:[%s5 + $0x10] sm:$0xff]
      %v731 = vld [vmem:[%s5 + $0x18] sm:$0xff]
      %733 = vset.pattern.permute.xlu0 0
      %734 = vperm.xlu0 %733, %v728
      %v735 = vpop.permute.xlu0 %734
      %738 = vset.pattern.permute.xlu0 0
      %739 = vperm.xlu0 %738, %v729
      %v740 = vpop.permute.xlu0 %739
      %743 = vset.pattern.permute.xlu0 0
      %744 = vperm.xlu0 %743, %v730
      %v745 = vpop.permute.xlu0 %744
      %748 = vset.pattern.permute.xlu0 0
      %749 = vperm.xlu0 %748, %v731
      %v750 = vpop.permute.xlu0 %749
      %v752 = vadd.f32 %v724, %v735
      %v753 = vadd.f32 %v725, %v740
      %v754 = vadd.f32 %v726, %v745
      %v755 = vadd.f32 %v727, %v750
      %v756 = vmax.f32 %v752, 0.0
      %v757 = vmax.f32 %v753, 0.0
      %v758 = vmax.f32 %v754, 0.0
      %v759 = vmax.f32 %v755, 0.0
      %760 = vst.msk [vmem:[%s389] sm:$0xff] %vm426, %v756
      %761 = vst.msk [vmem:[%s389 + $0x8] sm:$0xff] %vm426, %v757
      %762 = vst.msk [vmem:[%s389 + $0x10] sm:$0xff] %vm426, %v758
      %763 = vst.msk [vmem:[%s389 + $0x18] sm:$0xff] %vm426, %v759
      %v764 = vld [vmem:[%s6] sm:$0xff]
      %v765 = vld [vmem:[%s6 + $0x8] sm:$0xff]
      %v766 = vld [vmem:[%s6 + $0x10] sm:$0x7]
      %768 = vset.pattern.permute.xlu0 0
      %769 = vperm.xlu0 %768, %v764
      %v770 = vpop.permute.xlu0 %769
      %773 = vset.pattern.permute.xlu0 0
      %774 = vperm.xlu0 %773, %v765
      %v775 = vpop.permute.xlu0 %774
      %778 = vset.pattern.permute.xlu0 0
      %779 = vperm.xlu0 %778, %v766
      %v780 = vpop.permute.xlu0 %779
      %v782 = vmul.f32 %v573, %v770
      %v783 = vmul.f32 %v575, %v775
      %v784 = vmul.f32 %v577, %v780
      %785 = vst.msk [vmem:[%s397] sm:$0xff] %vm426, %v782
      %786 = vst.msk [vmem:[%s397 + $0x8] sm:$0xff] %vm426, %v783
      %787 = vst.msk [vmem:[%s397 + $0x10] sm:$0x7] %vm581, %v784
      %788 = vst.msk [vmem:[%s405] sm:$0xff] %vm426, %v591
      %789 = vst.msk [vmem:[%s405 + $0x8] sm:$0xff] %vm426, %v592
      %790 = vst.msk [vmem:[%s405 + $0x10] sm:$0x7] %vm581, %v593
      %p791 = scmp.lt.s32.totalorder %s26, 1
      %s792 = scalar_select %p791, %s26, 1
      %p793 = scmp.lt.s32.totalorder %s27, 0
      %s794 = scalar_select %p793, %s27, 0
      %s795 = smul.addr %s792, 4
      %s796 = sadd.s32 %s794, %s795
      %s797 = smul.addr %s796, 8
      %s798 = scalar_lea.vmem %s7, %s797
      %p799 = scmp.lt.s32.totalorder %s26, 1
      %s800 = scalar_select %p799, %s26, 1
      %p801 = scmp.lt.s32.totalorder %s27, 0
      %s802 = scalar_select %p801, %s27, 0
      %s803 = smul.addr %s800, 3
      %s804 = sadd.s32 %s802, %s803
      %s805 = smul.addr %s804, 8
      %s806 = scalar_lea.vmem %s8, %s805
      %p807 = scmp.lt.s32.totalorder %s26, 1
      %s808 = scalar_select %p807, %s26, 1
      %p809 = scmp.lt.s32.totalorder %s27, 0
      %s810 = scalar_select %p809, %s27, 0
      %s811 = smul.addr %s808, 3
      %s812 = sadd.s32 %s810, %s811
      %s813 = smul.addr %s812, 8
      %s814 = scalar_lea.vmem %s9, %s813
      // Predicated region
      $region49: #{_memory_read.3} parent=47 // pred_check
        %p815 = pneg %p208
      $region50: #{_memory_read.3} parent=47 // pred_check_branch
        %817 = sbr.rel (%p815) target = $region52
      $region51: #{_memory_read.3} parent=47 // pred_region
        _
      $region52: #{_memory_read.3} parent=47 // pred_fallthru
        _
      // Predicated region
      $region53: #{_memory_read.3} parent=47 // pred_check
        %p818 = pneg %p236
      $region54: #{_memory_read.3} parent=47 // pred_check_branch
        %820 = sbr.rel (%p818) target = $region56
      $region55: #{_memory_read.3} parent=47 // pred_region
        _
      $region56: #{_memory_read.3} parent=47 // pred_fallthru
        _
      // Predicated region
      $region57: #{_memory_read.3} parent=47 // pred_check
        %p821 = pneg %p264
      $region58: #{_memory_read.3} parent=47 // pred_check_branch
        %823 = sbr.rel (%p821) target = $region60
      $region59: #{_memory_read.3} parent=47 // pred_region
        _
      $region60: #{_memory_read.3} parent=47 // pred_fallthru
        _
    $region48: #{_memory_read.3} parent=5 // pred_fallthru
      _
    %p824 = scmp.le.s32.totalorder 2, %s17
    // Predicated region
    $region61: #{_memory_read.3} parent=5 // pred_check
      %p825 = pneg %p824
    $region62: #{_memory_read.3} parent=5 // pred_check_branch
      %827 = sbr.rel (%p825) target = $region64
    $region63: #{_memory_read.3} parent=5 // pred_region
      %s828 = ssub.s32 %s17, 2
      // Predicated region
      $region65: #{_memory_read.3} parent=63 // pred_check
        %p829 = pneg %p214
      $region66: #{_memory_read.3} parent=63 // pred_check_branch
        %831 = sbr.rel (%p829) target = $region68
      $region67: #{_memory_read.3} parent=63 // pred_region
        %p832 = scmp.lt.s32.totalorder %s28, 1
        %s833 = scalar_select %p832, %s28, 1
        %p834 = scmp.lt.s32.totalorder %s29, 0
        %s835 = scalar_select %p834, %s29, 0
        %s836 = smul.addr %s833, 4
        %s837 = sadd.s32 %s835, %s836
        %s838 = smul.addr %s837, 8
        %s839 = scalar_lea.vmem %s7, %s838
      $region68: #{_memory_read.3} parent=63 // pred_fallthru
        _
      // Predicated region
      $region69: #{_memory_read.3} parent=63 // pred_check
        %p840 = pneg %p242
      $region70: #{_memory_read.3} parent=63 // pred_check_branch
        %842 = sbr.rel (%p840) target = $region72
      $region71: #{_memory_read.3} parent=63 // pred_region
        %p843 = scmp.lt.s32.totalorder %s28, 1
        %s844 = scalar_select %p843, %s28, 1
        %p845 = scmp.lt.s32.totalorder %s29, 0
        %s846 = scalar_select %p845, %s29, 0
        %s847 = smul.addr %s844, 3
        %s848 = sadd.s32 %s846, %s847
        %s849 = smul.addr %s848, 8
        %s850 = scalar_lea.vmem %s8, %s849
      $region72: #{_memory_read.3} parent=63 // pred_fallthru
        _
      // Predicated region
      $region73: #{_memory_read.3} parent=63 // pred_check
        %p851 = pneg %p270
      $region74: #{_memory_read.3} parent=63 // pred_check_branch
        %853 = sbr.rel (%p851) target = $region76
      $region75: #{_memory_read.3} parent=63 // pred_region
        %p854 = scmp.lt.s32.totalorder %s28, 1
        %s855 = scalar_select %p854, %s28, 1
        %p856 = scmp.lt.s32.totalorder %s29, 0
        %s857 = scalar_select %p856, %s29, 0
        %s858 = smul.addr %s855, 3
        %s859 = sadd.s32 %s857, %s858
        %s860 = smul.addr %s859, 8
        %s861 = scalar_lea.vmem %s9, %s860
      $region76: #{_memory_read.3} parent=63 // pred_fallthru
        _
    $region64: #{_memory_read.3} parent=5 // pred_fallthru
      _
  $region6: #{_memory_read.3} parent=0 // loop_footer
    %s21 = sadd.s32 1, %s17
  $region7: #{_memory_read.3} parent=0 // loop_footer_branch
    %16 = sbr.rel target = $region3
  $region8: #{_memory_read.3} parent=0 // loop_exit
    _

</llo_original>
